<compile_context>
chip_gen: v7x
topology: tpu7x:2x2x1
jax: 0.10.0
libtpu: 0.0.40
codegen_flags: <defaults>
</compile_context>

<pallas_src>
import functools
import math

import jax
import jax.numpy as jnp
from jax.experimental import pallas as pl
from jax.experimental.pallas import tpu as pltpu

_VMEM_LIMIT_BYTES = 32 * 1024 * 1024  # fits scoped VMEM on v5e/v6e/v7x
_NEG_BIG = -1e30                       # finite "-inf": keeps exp(m_old-m_new) NaN-free


def _round_up(n, m):
    return ((n + m - 1) // m) * m


# --------------------------------------------------------------------------
# Pass 1: projection.  One lane-dense MXU call produces h_aug = [1 | h | 0],
# a second tiny 2-column matmul produces the per-node src/dst logits.
# --------------------------------------------------------------------------
def _proj_kernel(x_ref, waug_ref, wsd_ref, hagg_ref, s_ref):
    x = x_ref[...]                                                 # (tn, F_in)
    hfull = jnp.dot(x, waug_ref[...],
                    preferred_element_type=jnp.float32)            # (tn, PAD)
    lane = jax.lax.broadcasted_iota(jnp.int32, hfull.shape, 1)
    hagg = jnp.where(lane == 0, 1.0, hfull)        # col 0 := 1  (fused rowsum)
    hagg_ref[...] = hagg.astype(hagg_ref.dtype)
    # per-node logits [x @ (W a_src), x @ (W a_dst)] in one K=F_in matmul
    s_ref[...] = jnp.dot(x, wsd_ref[...],
                         preferred_element_type=jnp.float32)       # (tn, 2)


# --------------------------------------------------------------------------
# Pass 2: fused online-softmax attention + aggregation (single N^2 sweep).
# Per row-tile carries a running max m and accumulator acc = sum_j e @ [1|h|0]
# (rowsum comes out of column 0 for free); the adjacency is read exactly once.
# --------------------------------------------------------------------------
def _agg_kernel(s_src_ref, s_dst_ref, adj_ref, hagg_ref,
                acc_out_ref, m_out_ref, m_scr, acc_scr, *, alpha):
    j = pl.program_id(1)

    @pl.when(j == 0)
    def _():
        m_scr[...] = jnp.full_like(m_scr, _NEG_BIG)
        acc_scr[...] = jnp.zeros_like(acc_scr)

    scores = s_src_ref[...] + s_dst_ref[...]             # (ti,1)+(1,tj) rank-1
    leaky = jnp.maximum(scores, alpha * scores)           # LeakyReLU (alpha<1)
    adj = adj_ref[...].astype(jnp.float32)
    masked = jnp.where(adj > 0, leaky, _NEG_BIG)          # non-edges excluded
    m_old = m_scr[...]
    m_new = jnp.maximum(m_old, jnp.max(masked, axis=1, keepdims=True))
    corr = jnp.exp(m_old - m_new)                         # <= 1, finite always
    # clamp before exp: non-edges may exceed the running max (would overflow);
    # edges always satisfy leaky <= m_new, so the clamp is a no-op for them.
    p = adj * jnp.exp(jnp.minimum(leaky - m_new, 0.0))    # mask-multiply
    acc_scr[...] = corr * acc_scr[...] + jnp.dot(
        p.astype(hagg_ref.dtype), hagg_ref[...],
        preferred_element_type=jnp.float32)
    m_scr[...] = m_new

    @pl.when(j == pl.num_programs(1) - 1)
    def _():
        acc_out_ref[...] = acc_scr[...]
        m_out_ref[...] = m_scr[...]


# --------------------------------------------------------------------------
# Pass 3: tiny O(N*F_out) finalize.  Exact epsilon handling:
#   out_i = acc_i / (rowsum_i + 9e-15 * exp(m_global - m_i))
# which equals the reference's global-max softmax (multiply num/denom by
# exp(m_i - m_global)).
# --------------------------------------------------------------------------
def _finalize_kernel(mg_ref, acc_ref, m_ref, out_ref):
    mg = mg_ref[0, 0]                                     # global edge max (SMEM)
    acc = acc_ref[...]
    rowsum = acc[:, 0:1]                                  # fused ones column
    corr = jnp.exp(jnp.minimum(mg - m_ref[...], 80.0))    # clamp: rows w/o edges
    denom = rowsum + jnp.float32(9e-15) * corr
    out_ref[...] = (acc / denom).astype(out_ref.dtype)


# --------------------------------------------------------------------------
# Wrapper
# --------------------------------------------------------------------------
@functools.partial(jax.jit,
                   static_argnames=("alpha", "tile_i", "tile_j", "matmul_dtype"))
def sparse_gat_layer(x, W, attn, adj, *, alpha,
                     tile_i=256, tile_j=512, matmul_dtype=jnp.bfloat16):
    """x: (N, F_in) f32, W: (F_in, F_out) f32, attn: (1, 2*F_out) f32,
    adj: (N, N) {0,1} mask (any numeric/bool dtype).  Returns (N, F_out) f32."""
    x = jnp.asarray(x, jnp.float32)
    W = jnp.asarray(W, jnp.float32)
    attn = jnp.asarray(attn, jnp.float32)

    N, F_in = x.shape
    F_out = W.shape[1]
    PAD = _round_up(F_out + 1, 128)        # col 0 = ones, cols [1:1+F_out] = h

    # clamp tiles for small graphs; pad N so both tile sizes divide it exactly
    base = _round_up(N, 128)
    tile_i = min(tile_i, base)
    tile_j = min(tile_j, base)
    assert tile_i % 128 == 0 and tile_j % 128 == 0
    Np = _round_up(N, math.lcm(tile_i, tile_j))

    # ---- host-side weight prep (O(F_in*F_out), negligible) ---------------
    a_src = attn[0, :F_out]
    a_dst = attn[0, F_out:]
    w_aug = jnp.zeros((F_in, PAD), jnp.float32).at[:, 1:1 + F_out].set(W)
    w_sd = jnp.stack([W @ a_src, W @ a_dst], axis=1)     # (F_in, 2)

    # ---- pad node dimension; adjacency as int8 mask -----------------------
    x_p = jnp.zeros((Np, F_in), jnp.float32).at[:N].set(x)
    adj_i8 = (jnp.asarray(adj) != 0).astype(jnp.int8)
    adj_p = jnp.zeros((Np, Np), jnp.int8).at[:N, :N].set(adj_i8)

    # ---- pass 1: projection ------------------------------------------------
    tile_n = tile_i
    hagg, s = pl.pallas_call(
        _proj_kernel,
        grid=(Np // tile_n,),
        in_specs=[pl.BlockSpec((tile_n, F_in), lambda i: (i, 0)),
                  pl.BlockSpec((F_in, PAD), lambda i: (0, 0)),
                  pl.BlockSpec((F_in, 2), lambda i: (0, 0))],
        out_specs=[pl.BlockSpec((tile_n, PAD), lambda i: (i, 0)),
                   pl.BlockSpec((tile_n, 2), lambda i: (i, 0))],
        out_shape=[jax.ShapeDtypeStruct((Np, PAD), matmul_dtype),
                   jax.ShapeDtypeStruct((Np, 2), jnp.float32)],
        compiler_params=pltpu.CompilerParams(
            dimension_semantics=("parallel",),
            vmem_limit_bytes=_VMEM_LIMIT_BYTES),
    )(x_p, w_aug, w_sd)

    s_src = s[:, 0:1]                         # (Np, 1)
    s_dst = s[:, 1].reshape(1, Np)            # (1, Np)   layout plumbing only

    grid2 = (Np // tile_i, Np // tile_j)

    # ---- pass 2: fused online-softmax attention + aggregation ---------------
    acc, m_rows = pl.pallas_call(
        functools.partial(_agg_kernel, alpha=float(alpha)),
        grid=grid2,
        in_specs=[pl.BlockSpec((tile_i, 1), lambda i, j: (i, 0)),
                  pl.BlockSpec((1, tile_j), lambda i, j: (0, j)),
                  pl.BlockSpec((tile_i, tile_j), lambda i, j: (i, j)),
                  pl.BlockSpec((tile_j, PAD), lambda i, j: (j, 0))],
        out_specs=[pl.BlockSpec((tile_i, PAD), lambda i, j: (i, 0)),
                   pl.BlockSpec((tile_i, 1), lambda i, j: (i, 0))],
        out_shape=[jax.ShapeDtypeStruct((Np, PAD), jnp.float32),
                   jax.ShapeDtypeStruct((Np, 1), jnp.float32)],
        scratch_shapes=[pltpu.VMEM((tile_i, 1), jnp.float32),
                        pltpu.VMEM((tile_i, PAD), jnp.float32)],
        compiler_params=pltpu.CompilerParams(
            dimension_semantics=("parallel", "arbitrary"),
            vmem_limit_bytes=_VMEM_LIMIT_BYTES),
    )(s_src, s_dst, adj_p, hagg)

    # exact global edge max = max over per-row running maxima (padded rows are
    # -1e30 and never win); O(N) reduction in the wrapper.
    m_global = jnp.max(m_rows).reshape(1, 1)

    # ---- pass 3: finalize (global-max epsilon correction + divide) ----------
    out_p = pl.pallas_call(
        _finalize_kernel,
        grid=(Np // tile_i,),
        in_specs=[pl.BlockSpec((1, 1), lambda i: (0, 0),
                               memory_space=pltpu.MemorySpace.SMEM),
                  pl.BlockSpec((tile_i, PAD), lambda i: (i, 0)),
                  pl.BlockSpec((tile_i, 1), lambda i: (i, 0))],
        out_specs=pl.BlockSpec((tile_i, PAD), lambda i: (i, 0)),
        out_shape=jax.ShapeDtypeStruct((Np, PAD), jnp.float32),
        compiler_params=pltpu.CompilerParams(
            dimension_semantics=("parallel",),
            vmem_limit_bytes=_VMEM_LIMIT_BYTES),
    )(m_global, acc, m_rows)

    return out_p[:N, 1:1 + F_out]


# --------------------------------------------------------------------------
# Pure-JAX reference mirroring the PyTorch forward (for verification).
# --------------------------------------------------------------------------
def _reference(x, W, attn, adj_mask, alpha):
    h = x @ W
    F_out = W.shape[1]
    a_src, a_dst = attn[0, :F_out], attn[0, F_out:]
    scores = (h @ a_src)[:, None] + (h @ a_dst)[None, :]
    leaky = jnp.where(scores > 0, scores, alpha * scores)
    is_edge = adj_mask > 0
    m = jnp.max(jnp.where(is_edge, leaky, -jnp.inf))
    e = jnp.where(is_edge, jnp.exp(leaky - m), 0.0)
    rowsum = e.sum(axis=1, keepdims=True)
    return (e @ h) / (rowsum + 9e-15)


if __name__ == "__main__":
    alpha = 0.2      # LeakyReLU negative slope
    dropout = 0.6    # declared by the module but unused in forward()

    def make_inputs(case_key, N, F_in, F_out, density):
        kx, kw, ka, kadj = jax.random.split(case_key, 4)
        gain = 1.414   # matches nn.init.xavier_normal_(gain=1.414)
        std_w = gain * (2.0 / (F_in + F_out)) ** 0.5
        std_a = gain * (2.0 / (1 + 2 * F_out)) ** 0.5
        W = std_w * jax.random.normal(kw, (F_in, F_out), jnp.float32)
        attn = std_a * jax.random.normal(ka, (1, 2 * F_out), jnp.float32)
        x = jax.random.normal(kx, (N, F_in), jnp.float32)
        adj = jax.random.bernoulli(kadj, density, (N, N))
        adj = jnp.logical_or(adj, jnp.eye(N, dtype=bool)).astype(jnp.float32)
        return x, W, attn, adj

    key = jax.random.PRNGKey(0)
    k1, k2 = jax.random.split(key)

    cases = [
        # (key, N, F_in, F_out, tile_i, tile_j)
        (k1, 16, 8, 16, 128, 128),    # module-natural tiny graph (pads to 128)
        (k2, 384, 8, 16, 128, 256),   # multi-tile grid (4 x 2) with padding
    ]

    for case_key, N, F_in, F_out, ti, tj in cases:
        x, W, attn, adj = make_inputs(case_key, N, F_in, F_out, 0.3)
        ref = _reference(x, W, attn, adj, alpha)

        # exact-semantics mode (f32 MXU operands)
        out_f32 = sparse_gat_layer(x, W, attn, adj, alpha=alpha,
                                   tile_i=ti, tile_j=tj,
                                   matmul_dtype=jnp.float32)
        # performance mode (bf16 MXU operands, f32 accumulation)
        out_bf16 = sparse_gat_layer(x, W, attn, adj, alpha=alpha,
                                    tile_i=ti, tile_j=tj,
                                    matmul_dtype=jnp.bfloat16)
        out_f32, out_bf16 = jax.block_until_ready((out_f32, out_bf16))

        assert out_f32.shape == (N, F_out)
        assert out_bf16.shape == (N, F_out)
        assert jnp.allclose(out_f32, ref, atol=1e-4, rtol=1e-4)
        assert jnp.allclose(out_bf16, ref, atol=5e-2, rtol=5e-2)

    print("KERNEL_OK")
</pallas_src>

<mosaic_0001>
module attributes {stable_mosaic.version = 11 : i64} {
  func.func @_agg_kernel(%arg0: i32, %arg1: i32, %arg2: memref<128x1xf32, #tpu.memory_space<vmem>>, %arg3: memref<1x128xf32, #tpu.memory_space<vmem>>, %arg4: memref<128x128xi8, #tpu.memory_space<vmem>>, %arg5: memref<128x128xf32, #tpu.memory_space<vmem>>, %arg6: memref<128x128xf32, #tpu.memory_space<vmem>>, %arg7: memref<128x1xf32, #tpu.memory_space<vmem>>, %arg8: memref<128x1xf32, #tpu.memory_space<vmem>>, %arg9: memref<128x128xf32, #tpu.memory_space<vmem>>) attributes {dimension_semantics = [#tpu.dimension_semantics<parallel>, #tpu.dimension_semantics<arbitrary>], iteration_bounds = array<i64: 1, 1>, scalar_prefetch = 0 : i64, scratch_operands = 2 : i64, tpu.core_type = #tpu.core_type<tc>, window_params = [{transform_indices = @transform_0, window_bounds = array<i64: 128, 1>}, {transform_indices = @transform_1, window_bounds = array<i64: 1, 128>}, {transform_indices = @transform_2, window_bounds = array<i64: 128, 128>}, {transform_indices = @transform_3, window_bounds = array<i64: 128, 128>}, {transform_indices = @transform_4, window_bounds = array<i64: 128, 128>}, {transform_indices = @transform_5, window_bounds = array<i64: 128, 1>}]} {
    %c0_i32 = arith.constant 0 : i32
    %0 = arith.cmpi eq, %arg1, %c0_i32 : i32
    %1 = arith.extui %0 : i1 to i32
    %c0_i32_0 = arith.constant 0 : i32
    %2 = arith.cmpi ne, %1, %c0_i32_0 : i32
    scf.if %2 {
      %cst_23 = arith.constant -1.000000e+30 : f32
      %40 = vector.broadcast %cst_23 : f32 to vector<128x1xf32>
      %c0_24 = arith.constant 0 : index
      %c0_25 = arith.constant 0 : index
      %41 = vector.load %arg8[%c0_24, %c0_25] : memref<128x1xf32, #tpu.memory_space<vmem>>, vector<128x1xf32>
      tpu.vector_store %arg8[%c0_24, %c0_25], %40 {strides = array<i32>} : memref<128x1xf32, #tpu.memory_space<vmem>>, vector<128x1xf32>,
      %cst_26 = arith.constant 0.000000e+00 : f32
      %42 = vector.broadcast %cst_26 : f32 to vector<128x128xf32>
      %c0_27 = arith.constant 0 : index
      %c0_28 = arith.constant 0 : index
      %43 = vector.load %arg9[%c0_27, %c0_28] : memref<128x128xf32, #tpu.memory_space<vmem>>, vector<128x128xf32>
      tpu.vector_store %arg9[%c0_27, %c0_28], %42 {strides = array<i32>} : memref<128x128xf32, #tpu.memory_space<vmem>>, vector<128x128xf32>,
    } else {
    }
    %c0 = arith.constant 0 : index
    %c0_1 = arith.constant 0 : index
    %3 = vector.load %arg2[%c0, %c0_1] : memref<128x1xf32, #tpu.memory_space<vmem>>, vector<128x1xf32>
    %c0_2 = arith.constant 0 : index
    %c0_3 = arith.constant 0 : index
    %4 = vector.load %arg3[%c0_2, %c0_3] : memref<1x128xf32, #tpu.memory_space<vmem>>, vector<1x128xf32>
    %5 = vector.broadcast %3 : vector<128x1xf32> to vector<128x128xf32>
    %6 = vector.broadcast %4 : vector<1x128xf32> to vector<128x128xf32>
    %7 = arith.addf %5, %6 : vector<128x128xf32>
    %cst = arith.constant 2.000000e-01 : f32
    %8 = vector.broadcast %cst : f32 to vector<128x128xf32>
    %9 = arith.mulf %8, %7 : vector<128x128xf32>
    %10 = arith.maximumf %7, %9 : vector<128x128xf32>
    %c0_4 = arith.constant 0 : index
    %c0_5 = arith.constant 0 : index
    %11 = vector.load %arg4[%c0_4, %c0_5] : memref<128x128xi8, #tpu.memory_space<vmem>>, vector<128x128xi8>
    %12 = arith.sitofp %11 : vector<128x128xi8> to vector<128x128xf32>
    %cst_6 = arith.constant 0.000000e+00 : f32
    %13 = vector.broadcast %cst_6 : f32 to vector<128x128xf32>
    %14 = arith.cmpf ogt, %12, %13 : vector<128x128xf32>
    %cst_7 = arith.constant -1.000000e+30 : f32
    %15 = vector.broadcast %cst_7 : f32 to vector<128x128xf32>
    %16 = arith.select %14, %10, %15 : vector<128x128xi1>, vector<128x128xf32>
    %c0_8 = arith.constant 0 : index
    %c0_9 = arith.constant 0 : index
    %17 = vector.load %arg8[%c0_8, %c0_9] : memref<128x1xf32, #tpu.memory_space<vmem>>, vector<128x1xf32>
    %cst_10 = arith.constant dense<0xFF800000> : vector<128xf32>
    %18 = vector.multi_reduction <maximumf>, %16, %cst_10 [1] : vector<128x128xf32> to vector<128xf32>
    %19 = vector.shape_cast %18 : vector<128xf32> to vector<128x1xf32>
    %20 = arith.maximumf %17, %19 : vector<128x1xf32>
    %21 = arith.subf %17, %20 : vector<128x1xf32>
    %22 = math.exp %21 : vector<128x1xf32>
    %23 = vector.broadcast %20 : vector<128x1xf32> to vector<128x128xf32>
    %24 = arith.subf %10, %23 : vector<128x128xf32>
    %cst_11 = arith.constant 0.000000e+00 : f32
    %25 = vector.broadcast %cst_11 : f32 to vector<128x128xf32>
    %26 = arith.minimumf %24, %25 : vector<128x128xf32>
    %27 = math.exp %26 : vector<128x128xf32>
    %28 = arith.mulf %12, %27 : vector<128x128xf32>
    %c0_12 = arith.constant 0 : index
    %c0_13 = arith.constant 0 : index
    %29 = vector.load %arg9[%c0_12, %c0_13] : memref<128x128xf32, #tpu.memory_space<vmem>>, vector<128x128xf32>
    %30 = vector.broadcast %22 : vector<128x1xf32> to vector<128x128xf32>
    %31 = arith.mulf %30, %29 : vector<128x128xf32>
    %c0_14 = arith.constant 0 : index
    %c0_15 = arith.constant 0 : index
    %32 = vector.load %arg5[%c0_14, %c0_15] : memref<128x128xf32, #tpu.memory_space<vmem>>, vector<128x128xf32>
    %cst_16 = arith.constant dense<0.000000e+00> : vector<128x128xf32>
    %33 = tpu.matmul %28, %32, %cst_16 {dimension_numbers = #tpu.dot_dimension_numbers<[1], [0], [0], [1], [0, 0, 1, 1], [], []>} : vector<128x128xf32>, vector<128x128xf32>, vector<128x128xf32> -> vector<128x128xf32>
    %34 = arith.addf %31, %33 : vector<128x128xf32>
    %c0_17 = arith.constant 0 : index
    %c0_18 = arith.constant 0 : index
    %35 = vector.load %arg9[%c0_17, %c0_18] : memref<128x128xf32, #tpu.memory_space<vmem>>, vector<128x128xf32>
    tpu.vector_store %arg9[%c0_17, %c0_18], %34 {strides = array<i32>} : memref<128x128xf32, #tpu.memory_space<vmem>>, vector<128x128xf32>,
    %c0_19 = arith.constant 0 : index
    %c0_20 = arith.constant 0 : index
    %36 = vector.load %arg8[%c0_19, %c0_20] : memref<128x1xf32, #tpu.memory_space<vmem>>, vector<128x1xf32>
    tpu.vector_store %arg8[%c0_19, %c0_20], %20 {strides = array<i32>} : memref<128x1xf32, #tpu.memory_space<vmem>>, vector<128x1xf32>,
    %c0_i32_21 = arith.constant 0 : i32
    %37 = arith.cmpi eq, %arg1, %c0_i32_21 : i32
    %38 = arith.extui %37 : i1 to i32
    %c0_i32_22 = arith.constant 0 : i32
    %39 = arith.cmpi ne, %38, %c0_i32_22 : i32
    scf.if %39 {
      %c0_23 = arith.constant 0 : index
      %c0_24 = arith.constant 0 : index
      %40 = vector.load %arg9[%c0_23, %c0_24] : memref<128x128xf32, #tpu.memory_space<vmem>>, vector<128x128xf32>
      %c0_25 = arith.constant 0 : index
      %c0_26 = arith.constant 0 : index
      %41 = vector.load %arg6[%c0_25, %c0_26] : memref<128x128xf32, #tpu.memory_space<vmem>>, vector<128x128xf32>
      tpu.vector_store %arg6[%c0_25, %c0_26], %40 {strides = array<i32>} : memref<128x128xf32, #tpu.memory_space<vmem>>, vector<128x128xf32>,
      %c0_27 = arith.constant 0 : index
      %c0_28 = arith.constant 0 : index
      %42 = vector.load %arg8[%c0_27, %c0_28] : memref<128x1xf32, #tpu.memory_space<vmem>>, vector<128x1xf32>
      %c0_29 = arith.constant 0 : index
      %c0_30 = arith.constant 0 : index
      %43 = vector.load %arg7[%c0_29, %c0_30] : memref<128x1xf32, #tpu.memory_space<vmem>>, vector<128x1xf32>
      tpu.vector_store %arg7[%c0_29, %c0_30], %42 {strides = array<i32>} : memref<128x1xf32, #tpu.memory_space<vmem>>, vector<128x1xf32>,
    } else {
    }
    return
  }
  func.func @transform_0(%arg0: i32, %arg1: i32) -> (i32, i32) {
    %c0_i32 = arith.constant 0 : i32
    %c0_i32_0 = arith.constant 0 : i32
    return %arg0, %c0_i32 : i32, i32
  }
  func.func @transform_1(%arg0: i32, %arg1: i32) -> (i32, i32) {
    %c0_i32 = arith.constant 0 : i32
    %c0_i32_0 = arith.constant 0 : i32
    return %c0_i32, %arg1 : i32, i32
  }
  func.func @transform_2(%arg0: i32, %arg1: i32) -> (i32, i32) {
    %c0_i32 = arith.constant 0 : i32
    return %arg0, %arg1 : i32, i32
  }
  func.func @transform_3(%arg0: i32, %arg1: i32) -> (i32, i32) {
    %c0_i32 = arith.constant 0 : i32
    %c0_i32_0 = arith.constant 0 : i32
    return %arg1, %c0_i32 : i32, i32
  }
  func.func @transform_4(%arg0: i32, %arg1: i32) -> (i32, i32) {
    %c0_i32 = arith.constant 0 : i32
    %c0_i32_0 = arith.constant 0 : i32
    return %arg0, %c0_i32 : i32, i32
  }
  func.func @transform_5(%arg0: i32, %arg1: i32) -> (i32, i32) {
    %c0_i32 = arith.constant 0 : i32
    %c0_i32_0 = arith.constant 0 : i32
    return %arg0, %c0_i32 : i32, i32
  }
}

module attributes {stable_mosaic.version = 11 : i64} {
  func.func @_proj_kernel(%arg0: i32, %arg1: memref<128x8xf32, #tpu.memory_space<vmem>>, %arg2: memref<8x128xf32, #tpu.memory_space<vmem>>, %arg3: memref<8x2xf32, #tpu.memory_space<vmem>>, %arg4: memref<128x128xf32, #tpu.memory_space<vmem>>, %arg5: memref<128x2xf32, #tpu.memory_space<vmem>>) attributes {dimension_semantics = [#tpu.dimension_semantics<parallel>], iteration_bounds = array<i64: 1>, scalar_prefetch = 0 : i64, scratch_operands = 0 : i64, tpu.core_type = #tpu.core_type<tc>, window_params = [{transform_indices = @transform_0, window_bounds = array<i64: 128, 8>}, {pipeline_mode = #tpu.pipeline_mode<synchronous>, transform_indices = @transform_1, window_bounds = array<i64: 8, 128>}, {pipeline_mode = #tpu.pipeline_mode<synchronous>, transform_indices = @transform_2, window_bounds = array<i64: 8, 2>}, {transform_indices = @transform_3, window_bounds = array<i64: 128, 128>}, {transform_indices = @transform_4, window_bounds = array<i64: 128, 2>}]} {
    %c0 = arith.constant 0 : index
    %c0_0 = arith.constant 0 : index
    %0 = vector.load %arg1[%c0, %c0_0] : memref<128x8xf32, #tpu.memory_space<vmem>>, vector<128x8xf32>
    %c0_1 = arith.constant 0 : index
    %c0_2 = arith.constant 0 : index
    %1 = vector.load %arg2[%c0_1, %c0_2] : memref<8x128xf32, #tpu.memory_space<vmem>>, vector<8x128xf32>
    %cst = arith.constant dense<0.000000e+00> : vector<128x128xf32>
    %2 = tpu.matmul %0, %1, %cst {dimension_numbers = #tpu.dot_dimension_numbers<[1], [0], [0], [1], [0, 0, 1, 1], [], []>} : vector<128x8xf32>, vector<8x128xf32>, vector<128x128xf32> -> vector<128x128xf32>
    %3 = tpu.iota {dimensions = array<i32: 1>} : vector<128x128xi32>
    %c0_i32 = arith.constant 0 : i32
    %4 = vector.broadcast %c0_i32 : i32 to vector<128x128xi32>
    %5 = arith.cmpi eq, %3, %4 : vector<128x128xi32>
    %cst_3 = arith.constant 1.000000e+00 : f32
    %6 = vector.broadcast %cst_3 : f32 to vector<128x128xf32>
    %7 = arith.select %5, %6, %2 : vector<128x128xi1>, vector<128x128xf32>
    %c0_4 = arith.constant 0 : index
    %c0_5 = arith.constant 0 : index
    %8 = vector.load %arg4[%c0_4, %c0_5] : memref<128x128xf32, #tpu.memory_space<vmem>>, vector<128x128xf32>
    tpu.vector_store %arg4[%c0_4, %c0_5], %7 {strides = array<i32>} : memref<128x128xf32, #tpu.memory_space<vmem>>, vector<128x128xf32>,
    %c0_6 = arith.constant 0 : index
    %c0_7 = arith.constant 0 : index
    %9 = vector.load %arg3[%c0_6, %c0_7] : memref<8x2xf32, #tpu.memory_space<vmem>>, vector<8x2xf32>
    %cst_8 = arith.constant dense<0.000000e+00> : vector<128x2xf32>
    %10 = tpu.matmul %0, %9, %cst_8 {dimension_numbers = #tpu.dot_dimension_numbers<[1], [0], [0], [1], [0, 0, 1, 1], [], []>} : vector<128x8xf32>, vector<8x2xf32>, vector<128x2xf32> -> vector<128x2xf32>
    %c0_9 = arith.constant 0 : index
    %c0_10 = arith.constant 0 : index
    %11 = vector.load %arg5[%c0_9, %c0_10] : memref<128x2xf32, #tpu.memory_space<vmem>>, vector<128x2xf32>
    tpu.vector_store %arg5[%c0_9, %c0_10], %10 {strides = array<i32>} : memref<128x2xf32, #tpu.memory_space<vmem>>, vector<128x2xf32>,
    return
  }
  func.func @transform_0(%arg0: i32) -> (i32, i32) {
    %c0_i32 = arith.constant 0 : i32
    %c0_i32_0 = arith.constant 0 : i32
    return %arg0, %c0_i32 : i32, i32
  }
  func.func @transform_1(%arg0: i32) -> (i32, i32) {
    %c0_i32 = arith.constant 0 : i32
    %c0_i32_0 = arith.constant 0 : i32
    %c0_i32_1 = arith.constant 0 : i32
    return %c0_i32, %c0_i32_0 : i32, i32
  }
  func.func @transform_2(%arg0: i32) -> (i32, i32) {
    %c0_i32 = arith.constant 0 : i32
    %c0_i32_0 = arith.constant 0 : i32
    %c0_i32_1 = arith.constant 0 : i32
    return %c0_i32, %c0_i32_0 : i32, i32
  }
  func.func @transform_3(%arg0: i32) -> (i32, i32) {
    %c0_i32 = arith.constant 0 : i32
    %c0_i32_0 = arith.constant 0 : i32
    return %arg0, %c0_i32 : i32, i32
  }
  func.func @transform_4(%arg0: i32) -> (i32, i32) {
    %c0_i32 = arith.constant 0 : i32
    %c0_i32_0 = arith.constant 0 : i32
    return %arg0, %c0_i32 : i32, i32
  }
}

module attributes {stable_mosaic.version = 11 : i64} {
  func.func @_finalize_kernel(%arg0: i32, %arg1: memref<1x1xf32, #tpu.memory_space<smem>>, %arg2: memref<128x128xf32, #tpu.memory_space<vmem>>, %arg3: memref<128x1xf32, #tpu.memory_space<vmem>>, %arg4: memref<128x128xf32, #tpu.memory_space<vmem>>) attributes {dimension_semantics = [#tpu.dimension_semantics<parallel>], iteration_bounds = array<i64: 1>, scalar_prefetch = 0 : i64, scratch_operands = 0 : i64, tpu.core_type = #tpu.core_type<tc>, window_params = [{transform_indices = @transform_0, window_bounds = array<i64: 1, 1>}, {transform_indices = @transform_1, window_bounds = array<i64: 128, 128>}, {transform_indices = @transform_2, window_bounds = array<i64: 128, 1>}, {transform_indices = @transform_3, window_bounds = array<i64: 128, 128>}]} {
    %c0 = arith.constant 0 : index
    %c0_0 = arith.constant 0 : index
    %0 = memref.load %arg1[%c0, %c0_0] : memref<1x1xf32, #tpu.memory_space<smem>>
    %c0_1 = arith.constant 0 : index
    %c0_2 = arith.constant 0 : index
    %1 = vector.load %arg2[%c0_1, %c0_2] : memref<128x128xf32, #tpu.memory_space<vmem>>, vector<128x128xf32>
    %2 = vector.extract_strided_slice %1 {offsets = [0, 0], sizes = [128, 1], strides = [1, 1]} : vector<128x128xf32> to vector<128x1xf32>
    %c0_3 = arith.constant 0 : index
    %c0_4 = arith.constant 0 : index
    %3 = vector.load %arg3[%c0_3, %c0_4] : memref<128x1xf32, #tpu.memory_space<vmem>>, vector<128x1xf32>
    %4 = vector.broadcast %0 : f32 to vector<128x1xf32>
    %5 = arith.subf %4, %3 : vector<128x1xf32>
    %cst = arith.constant 8.000000e+01 : f32
    %6 = vector.broadcast %cst : f32 to vector<128x1xf32>
    %7 = arith.minimumf %5, %6 : vector<128x1xf32>
    %8 = math.exp %7 : vector<128x1xf32>
    %cst_5 = arith.constant 9.000000e-15 : f32
    %9 = vector.broadcast %cst_5 : f32 to vector<128x1xf32>
    %10 = arith.mulf %9, %8 : vector<128x1xf32>
    %11 = arith.addf %2, %10 : vector<128x1xf32>
    %12 = vector.broadcast %11 : vector<128x1xf32> to vector<128x128xf32>
    %13 = arith.divf %1, %12 : vector<128x128xf32>
    %c0_6 = arith.constant 0 : index
    %c0_7 = arith.constant 0 : index
    %14 = vector.load %arg4[%c0_6, %c0_7] : memref<128x128xf32, #tpu.memory_space<vmem>>, vector<128x128xf32>
    tpu.vector_store %arg4[%c0_6, %c0_7], %13 {strides = array<i32>} : memref<128x128xf32, #tpu.memory_space<vmem>>, vector<128x128xf32>,
    return
  }
  func.func @transform_0(%arg0: i32) -> (i32, i32) {
    %c0_i32 = arith.constant 0 : i32
    %c0_i32_0 = arith.constant 0 : i32
    %c0_i32_1 = arith.constant 0 : i32
    return %c0_i32, %c0_i32_0 : i32, i32
  }
  func.func @transform_1(%arg0: i32) -> (i32, i32) {
    %c0_i32 = arith.constant 0 : i32
    %c0_i32_0 = arith.constant 0 : i32
    return %arg0, %c0_i32 : i32, i32
  }
  func.func @transform_2(%arg0: i32) -> (i32, i32) {
    %c0_i32 = arith.constant 0 : i32
    %c0_i32_0 = arith.constant 0 : i32
    return %arg0, %c0_i32 : i32, i32
  }
  func.func @transform_3(%arg0: i32) -> (i32, i32) {
    %c0_i32 = arith.constant 0 : i32
    %c0_i32_0 = arith.constant 0 : i32
    return %arg0, %c0_i32 : i32, i32
  }
}

</mosaic_0001>

<llo_original>
// kernel: sparse_gat_layer.3
$region0: #{sparse_gat_layer.3}
  #allocation0 [shape = 'u32[]', space=smem, size = 0x4, offset = 0x4, fixed_abs, tag = 'smem constant byte address 0x4 - core index']
  #allocation1 [shape = 'u32[144,128]{1,0:T(1,128)}', space=vmem, size = 0x12000, scoped, tag = 'internal scratch']
  %s0 = inlined_call_operand.vmem [shape: f32[128,8], index: 0, kind: input, shape index: {}]
  %s1 = inlined_call_operand.vmem [shape: f32[8,128], index: 1, kind: input, shape index: {}]
  %s2 = inlined_call_operand.vmem [shape: f32[8,2], index: 2, kind: input, shape index: {}]
  %s3 = inlined_call_operand.vmem [shape: f32[128,128], index: 3, kind: output, shape index: {0}]
  %s4 = inlined_call_operand.vmem [shape: f32[128,2], index: 4, kind: output, shape index: {1}]
  %5 = xla_tuple %s3, %s4
  %s6 = sld [smem:[#allocation0]]
  $region30: #{sparse_gat_layer.3} parent=0
    _
  %s8 = ssub.s32 1, %s6
  %s9 = scalar_select 0, %s8, %s6
  // Predicated region
  $region2: #{sparse_gat_layer.3} parent=0 // pred_check
    _
  $region3: #{sparse_gat_layer.3} parent=0 // pred_check_branch
    %11 = sbr.rel (0) target = $region5
  $region4: #{sparse_gat_layer.3} parent=0 // pred_region
    _
  $region5: #{sparse_gat_layer.3} parent=0 // pred_fallthru
    _
  // Predicated region
  $region6: #{sparse_gat_layer.3} parent=0 // pred_check
    _
  $region7: #{sparse_gat_layer.3} parent=0 // pred_check_branch
    %13 = sbr.rel (0) target = $region9
  $region8: #{sparse_gat_layer.3} parent=0 // pred_region
    _
  $region9: #{sparse_gat_layer.3} parent=0 // pred_fallthru
    _
  // Predicated region
  $region10: #{sparse_gat_layer.3} parent=0 // pred_check
    _
  $region11: #{sparse_gat_layer.3} parent=0 // pred_check_branch
    %15 = sbr.rel (0) target = $region13
  $region12: #{sparse_gat_layer.3} parent=0 // pred_region
    _
  $region13: #{sparse_gat_layer.3} parent=0 // pred_fallthru
    _
  %v16 = vld [vmem:[%s0] sm:$0xff]
  %v17 = vld [vmem:[%s0 + $0x8] sm:$0xff]
  %v18 = vld [vmem:[%s0 + $0x10] sm:$0xff]
  %v19 = vld [vmem:[%s0 + $0x18] sm:$0xff]
  %v20 = vld [vmem:[%s0 + $0x20] sm:$0xff]
  %v21 = vld [vmem:[%s0 + $0x28] sm:$0xff]
  %v22 = vld [vmem:[%s0 + $0x30] sm:$0xff]
  %v23 = vld [vmem:[%s0 + $0x38] sm:$0xff]
  %v24 = vld [vmem:[%s0 + $0x40] sm:$0xff]
  %v25 = vld [vmem:[%s0 + $0x48] sm:$0xff]
  %v26 = vld [vmem:[%s0 + $0x50] sm:$0xff]
  %v27 = vld [vmem:[%s0 + $0x58] sm:$0xff]
  %v28 = vld [vmem:[%s0 + $0x60] sm:$0xff]
  %v29 = vld [vmem:[%s0 + $0x68] sm:$0xff]
  %v30 = vld [vmem:[%s0 + $0x70] sm:$0xff]
  %v31 = vld [vmem:[%s0 + $0x78] sm:$0xff]
  %v32 = vld [vmem:[%s1] sm:$0xff]
  %vm33 = vcmask 64512
  %v35 = vsel %vm33, %v16, 0
  %v38 = vsel %vm33, %v17, 0
  %v41 = vsel %vm33, %v18, 0
  %v44 = vsel %vm33, %v19, 0
  %v47 = vsel %vm33, %v20, 0
  %v50 = vsel %vm33, %v21, 0
  %v53 = vsel %vm33, %v22, 0
  %v56 = vsel %vm33, %v23, 0
  %v59 = vsel %vm33, %v24, 0
  %v62 = vsel %vm33, %v25, 0
  %v65 = vsel %vm33, %v26, 0
  %v68 = vsel %vm33, %v27, 0
  %v71 = vsel %vm33, %v28, 0
  %v74 = vsel %vm33, %v29, 0
  %v77 = vsel %vm33, %v30, 0
  %v80 = vsel %vm33, %v31, 0
  %82 = vmatprep.subr.mxu0 0.0
  %83 = vmatpush1.msra.mxu0 %v32
  %84 = vmatprep.subr.mxu0 0.0
  %85 = vmatpush1.msra.mxu0 0.0
  %86 = vmatprep.subr.mxu0 0.0
  %87 = vmatpush1.msra.mxu0 0.0
  %88 = vmatprep.subr.mxu0 0.0
  %89 = vmatpush1.msra.mxu0 0.0
  %90 = vmatprep.subr.mxu0 0.0
  %91 = vmatpush1.msra.mxu0 0.0
  %92 = vmatprep.subr.mxu0 0.0
  %93 = vmatpush1.msra.mxu0 0.0
  %94 = vmatprep.subr.mxu0 0.0
  %95 = vmatpush1.msra.mxu0 0.0
  %96 = vmatprep.subr.mxu0 0.0
  %97 = vmatpush1.msra.mxu0 0.0
  %98 = vmatprep.subr.mxu0 0.0
  %99 = vmatpush1.msra.mxu0 0.0
  %100 = vmatprep.subr.mxu0 0.0
  %101 = vmatpush1.msra.mxu0 0.0
  %102 = vmatprep.subr.mxu0 0.0
  %103 = vmatpush1.msra.mxu0 0.0
  %104 = vmatprep.subr.mxu0 0.0
  %105 = vmatpush1.msra.mxu0 0.0
  %106 = vmatprep.subr.mxu0 0.0
  %107 = vmatpush1.msra.mxu0 0.0
  %108 = vmatprep.subr.mxu0 0.0
  %109 = vmatpush1.msra.mxu0 0.0
  %110 = vmatprep.subr.mxu0 0.0
  %111 = vmatpush1.msra.mxu0 0.0
  %112 = vmatprep.subr.mxu0 0.0
  %113 = vmatpush1.msra.mxu0 0.0
  %114 = vmatprep.subr.mxu0 0.0
  %115 = vmatpush1.msra.mxu0 0.0
  %116 = vmatprep.subr.mxu0 0.0
  %117 = vmatpush1.msra.mxu0 0.0
  %118 = vmatprep.subr.mxu0 0.0
  %119 = vmatpush1.msra.mxu0 0.0
  %120 = vmatprep.subr.mxu0 0.0
  %121 = vmatpush1.msra.mxu0 0.0
  %122 = vmatprep.subr.mxu0 0.0
  %123 = vmatpush1.msra.mxu0 0.0
  %124 = vmatprep.subr.mxu0 0.0
  %125 = vmatpush1.msra.mxu0 0.0
  %126 = vmatprep.subr.mxu0 0.0
  %127 = vmatpush1.msra.mxu0 0.0
  %128 = vmatprep.subr.mxu0 0.0
  %129 = vmatpush1.msra.mxu0 0.0
  %130 = vmatprep.subr.mxu0 0.0
  %131 = vmatpush1.msra.mxu0 0.0
  %132 = vmatprep.subr.mxu0 0.0
  %133 = vmatpush1.msra.mxu0 0.0
  %134 = vmatprep.subr.mxu0 0.0
  %135 = vmatpush1.msra.mxu0 0.0
  %136 = vmatprep.subr.mxu0 0.0
  %137 = vmatpush1.msra.mxu0 0.0
  %138 = vmatprep.subr.mxu0 0.0
  %139 = vmatpush1.msra.mxu0 0.0
  %140 = vmatprep.subr.mxu0 0.0
  %141 = vmatpush1.msra.mxu0 0.0
  %142 = vmatprep.subr.mxu0 0.0
  %143 = vmatpush1.msra.mxu0 0.0
  %144 = vmatprep.subr.mxu0 0.0
  %145 = vmatpush1.msra.mxu0 0.0
  %146 = vmatprep.mubr.f32.mxu0 0.0
  %147 = vmatmul.mubr.f32.gmra.mrb[0].mxu0 %v35
  %v148 = vpop.f32.mrb[0].mxu0
  %v149 = vadd.f32 0.0, %v148
  %v150 = vpop.f32.mrb[0].mxu0
  %151 = vmatprep.mubr.f32.mxu0 0.0
  %152 = vmatmul.mubr.f32.gmra.mrb[0].mxu0 %v38
  %v153 = vpop.f32.mrb[0].mxu0
  %v154 = vadd.f32 0.0, %v153
  %v155 = vpop.f32.mrb[0].mxu0
  %156 = vmatprep.mubr.f32.mxu0 0.0
  %157 = vmatmul.mubr.f32.gmra.mrb[0].mxu0 %v41
  %v158 = vpop.f32.mrb[0].mxu0
  %v159 = vadd.f32 0.0, %v158
  %v160 = vpop.f32.mrb[0].mxu0
  %161 = vmatprep.mubr.f32.mxu0 0.0
  %162 = vmatmul.mubr.f32.gmra.mrb[0].mxu0 %v44
  %v163 = vpop.f32.mrb[0].mxu0
  %v164 = vadd.f32 0.0, %v163
  %v165 = vpop.f32.mrb[0].mxu0
  %166 = vmatprep.mubr.f32.mxu0 0.0
  %167 = vmatmul.mubr.f32.gmra.mrb[0].mxu0 %v47
  %v168 = vpop.f32.mrb[0].mxu0
  %v169 = vadd.f32 0.0, %v168
  %v170 = vpop.f32.mrb[0].mxu0
  %171 = vmatprep.mubr.f32.mxu0 0.0
  %172 = vmatmul.mubr.f32.gmra.mrb[0].mxu0 %v50
  %v173 = vpop.f32.mrb[0].mxu0
  %v174 = vadd.f32 0.0, %v173
  %v175 = vpop.f32.mrb[0].mxu0
  %176 = vmatprep.mubr.f32.mxu0 0.0
  %177 = vmatmul.mubr.f32.gmra.mrb[0].mxu0 %v53
  %v178 = vpop.f32.mrb[0].mxu0
  %v179 = vadd.f32 0.0, %v178
  %v180 = vpop.f32.mrb[0].mxu0
  %181 = vmatprep.mubr.f32.mxu0 0.0
  %182 = vmatmul.mubr.f32.gmra.mrb[0].mxu0 %v56
  %v183 = vpop.f32.mrb[0].mxu0
  %v184 = vadd.f32 0.0, %v183
  %v185 = vpop.f32.mrb[0].mxu0
  %186 = vmatprep.mubr.f32.mxu0 0.0
  %187 = vmatmul.mubr.f32.gmra.mrb[0].mxu0 %v59
  %v188 = vpop.f32.mrb[0].mxu0
  %v189 = vadd.f32 0.0, %v188
  %v190 = vpop.f32.mrb[0].mxu0
  %191 = vmatprep.mubr.f32.mxu0 0.0
  %192 = vmatmul.mubr.f32.gmra.mrb[0].mxu0 %v62
  %v193 = vpop.f32.mrb[0].mxu0
  %v194 = vadd.f32 0.0, %v193
  %v195 = vpop.f32.mrb[0].mxu0
  %196 = vmatprep.mubr.f32.mxu0 0.0
  %197 = vmatmul.mubr.f32.gmra.mrb[0].mxu0 %v65
  %v198 = vpop.f32.mrb[0].mxu0
  %v199 = vadd.f32 0.0, %v198
  %v200 = vpop.f32.mrb[0].mxu0
  %201 = vmatprep.mubr.f32.mxu0 0.0
  %202 = vmatmul.mubr.f32.gmra.mrb[0].mxu0 %v68
  %v203 = vpop.f32.mrb[0].mxu0
  %v204 = vadd.f32 0.0, %v203
  %v205 = vpop.f32.mrb[0].mxu0
  %206 = vmatprep.mubr.f32.mxu0 0.0
  %207 = vmatmul.mubr.f32.gmra.mrb[0].mxu0 %v71
  %v208 = vpop.f32.mrb[0].mxu0
  %v209 = vadd.f32 0.0, %v208
  %v210 = vpop.f32.mrb[0].mxu0
  %211 = vmatprep.mubr.f32.mxu0 0.0
  %212 = vmatmul.mubr.f32.gmra.mrb[0].mxu0 %v74
  %v213 = vpop.f32.mrb[0].mxu0
  %v214 = vadd.f32 0.0, %v213
  %v215 = vpop.f32.mrb[0].mxu0
  %216 = vmatprep.mubr.f32.mxu0 0.0
  %217 = vmatmul.mubr.f32.gmra.mrb[0].mxu0 %v77
  %v218 = vpop.f32.mrb[0].mxu0
  %v219 = vadd.f32 0.0, %v218
  %v220 = vpop.f32.mrb[0].mxu0
  %221 = vmatprep.mubr.f32.mxu0 0.0
  %222 = vmatmul.mubr.f32.gmra.mrb[0].mxu0 %v80
  %v223 = vpop.f32.mrb[0].mxu0
  %v224 = vadd.f32 0.0, %v223
  %v225 = vpop.f32.mrb[0].mxu0
  %226 = vdwg.mxu0
  %v227 = vlaneseq
  %v228 = vand.u32 %v227, 127
  %vm229 = vcmp.eq.s32.totalorder %v228, 0
  %v230 = vsel %vm229, 1.0, %v149
  %v231 = vsel %vm229, 1.0, %v154
  %v232 = vsel %vm229, 1.0, %v159
  %v233 = vsel %vm229, 1.0, %v164
  %v234 = vsel %vm229, 1.0, %v169
  %v235 = vsel %vm229, 1.0, %v174
  %v236 = vsel %vm229, 1.0, %v179
  %v237 = vsel %vm229, 1.0, %v184
  %v238 = vsel %vm229, 1.0, %v189
  %v239 = vsel %vm229, 1.0, %v194
  %v240 = vsel %vm229, 1.0, %v199
  %v241 = vsel %vm229, 1.0, %v204
  %v242 = vsel %vm229, 1.0, %v209
  %v243 = vsel %vm229, 1.0, %v214
  %v244 = vsel %vm229, 1.0, %v219
  %v245 = vsel %vm229, 1.0, %v224
  %246 = vst [vmem:[%s3] sm:$0xff] %v230
  %247 = vst [vmem:[%s3 + $0x8] sm:$0xff] %v231
  %248 = vst [vmem:[%s3 + $0x10] sm:$0xff] %v232
  %249 = vst [vmem:[%s3 + $0x18] sm:$0xff] %v233
  %250 = vst [vmem:[%s3 + $0x20] sm:$0xff] %v234
  %251 = vst [vmem:[%s3 + $0x28] sm:$0xff] %v235
  %252 = vst [vmem:[%s3 + $0x30] sm:$0xff] %v236
  %253 = vst [vmem:[%s3 + $0x38] sm:$0xff] %v237
  %254 = vst [vmem:[%s3 + $0x40] sm:$0xff] %v238
  %255 = vst [vmem:[%s3 + $0x48] sm:$0xff] %v239
  %256 = vst [vmem:[%s3 + $0x50] sm:$0xff] %v240
  %257 = vst [vmem:[%s3 + $0x58] sm:$0xff] %v241
  %258 = vst [vmem:[%s3 + $0x60] sm:$0xff] %v242
  %259 = vst [vmem:[%s3 + $0x68] sm:$0xff] %v243
  %260 = vst [vmem:[%s3 + $0x70] sm:$0xff] %v244
  %261 = vst [vmem:[%s3 + $0x78] sm:$0xff] %v245
  %v262 = vld [vmem:[%s2] sm:$0xff]
  %263 = vmatprep.subr.mxu0 0.0
  %264 = vmatpush1.msra.mxu0 %v262
  %265 = vmatprep.subr.mxu0 0.0
  %266 = vmatpush1.msra.mxu0 0.0
  %267 = vmatprep.subr.mxu0 0.0
  %268 = vmatpush1.msra.mxu0 0.0
  %269 = vmatprep.subr.mxu0 0.0
  %270 = vmatpush1.msra.mxu0 0.0
  %271 = vmatprep.subr.mxu0 0.0
  %272 = vmatpush1.msra.mxu0 0.0
  %273 = vmatprep.subr.mxu0 0.0
  %274 = vmatpush1.msra.mxu0 0.0
  %275 = vmatprep.subr.mxu0 0.0
  %276 = vmatpush1.msra.mxu0 0.0
  %277 = vmatprep.subr.mxu0 0.0
  %278 = vmatpush1.msra.mxu0 0.0
  %279 = vmatprep.subr.mxu0 0.0
  %280 = vmatpush1.msra.mxu0 0.0
  %281 = vmatprep.subr.mxu0 0.0
  %282 = vmatpush1.msra.mxu0 0.0
  %283 = vmatprep.subr.mxu0 0.0
  %284 = vmatpush1.msra.mxu0 0.0
  %285 = vmatprep.subr.mxu0 0.0
  %286 = vmatpush1.msra.mxu0 0.0
  %287 = vmatprep.subr.mxu0 0.0
  %288 = vmatpush1.msra.mxu0 0.0
  %289 = vmatprep.subr.mxu0 0.0
  %290 = vmatpush1.msra.mxu0 0.0
  %291 = vmatprep.subr.mxu0 0.0
  %292 = vmatpush1.msra.mxu0 0.0
  %293 = vmatprep.subr.mxu0 0.0
  %294 = vmatpush1.msra.mxu0 0.0
  %295 = vmatprep.subr.mxu0 0.0
  %296 = vmatpush1.msra.mxu0 0.0
  %297 = vmatprep.subr.mxu0 0.0
  %298 = vmatpush1.msra.mxu0 0.0
  %299 = vmatprep.subr.mxu0 0.0
  %300 = vmatpush1.msra.mxu0 0.0
  %301 = vmatprep.subr.mxu0 0.0
  %302 = vmatpush1.msra.mxu0 0.0
  %303 = vmatprep.subr.mxu0 0.0
  %304 = vmatpush1.msra.mxu0 0.0
  %305 = vmatprep.subr.mxu0 0.0
  %306 = vmatpush1.msra.mxu0 0.0
  %307 = vmatprep.subr.mxu0 0.0
  %308 = vmatpush1.msra.mxu0 0.0
  %309 = vmatprep.subr.mxu0 0.0
  %310 = vmatpush1.msra.mxu0 0.0
  %311 = vmatprep.subr.mxu0 0.0
  %312 = vmatpush1.msra.mxu0 0.0
  %313 = vmatprep.subr.mxu0 0.0
  %314 = vmatpush1.msra.mxu0 0.0
  %315 = vmatprep.subr.mxu0 0.0
  %316 = vmatpush1.msra.mxu0 0.0
  %317 = vmatprep.subr.mxu0 0.0
  %318 = vmatpush1.msra.mxu0 0.0
  %319 = vmatprep.subr.mxu0 0.0
  %320 = vmatpush1.msra.mxu0 0.0
  %321 = vmatprep.subr.mxu0 0.0
  %322 = vmatpush1.msra.mxu0 0.0
  %323 = vmatprep.subr.mxu0 0.0
  %324 = vmatpush1.msra.mxu0 0.0
  %325 = vmatprep.subr.mxu0 0.0
  %326 = vmatpush1.msra.mxu0 0.0
  %327 = vmatprep.mubr.f32.mxu0 0.0
  %328 = vmatmul.mubr.f32.gmra.mrb[0].mxu0 %v35
  %v329 = vpop.f32.mrb[0].mxu0
  %v330 = vadd.f32 0.0, %v329
  %v331 = vpop.f32.mrb[0].mxu0
  %332 = vmatprep.mubr.f32.mxu0 0.0
  %333 = vmatmul.mubr.f32.gmra.mrb[0].mxu0 %v38
  %v334 = vpop.f32.mrb[0].mxu0
  %v335 = vadd.f32 0.0, %v334
  %v336 = vpop.f32.mrb[0].mxu0
  %337 = vmatprep.mubr.f32.mxu0 0.0
  %338 = vmatmul.mubr.f32.gmra.mrb[0].mxu0 %v41
  %v339 = vpop.f32.mrb[0].mxu0
  %v340 = vadd.f32 0.0, %v339
  %v341 = vpop.f32.mrb[0].mxu0
  %342 = vmatprep.mubr.f32.mxu0 0.0
  %343 = vmatmul.mubr.f32.gmra.mrb[0].mxu0 %v44
  %v344 = vpop.f32.mrb[0].mxu0
  %v345 = vadd.f32 0.0, %v344
  %v346 = vpop.f32.mrb[0].mxu0
  %347 = vmatprep.mubr.f32.mxu0 0.0
  %348 = vmatmul.mubr.f32.gmra.mrb[0].mxu0 %v47
  %v349 = vpop.f32.mrb[0].mxu0
  %v350 = vadd.f32 0.0, %v349
  %v351 = vpop.f32.mrb[0].mxu0
  %352 = vmatprep.mubr.f32.mxu0 0.0
  %353 = vmatmul.mubr.f32.gmra.mrb[0].mxu0 %v50
  %v354 = vpop.f32.mrb[0].mxu0
  %v355 = vadd.f32 0.0, %v354
  %v356 = vpop.f32.mrb[0].mxu0
  %357 = vmatprep.mubr.f32.mxu0 0.0
  %358 = vmatmul.mubr.f32.gmra.mrb[0].mxu0 %v53
  %v359 = vpop.f32.mrb[0].mxu0
  %v360 = vadd.f32 0.0, %v359
  %v361 = vpop.f32.mrb[0].mxu0
  %362 = vmatprep.mubr.f32.mxu0 0.0
  %363 = vmatmul.mubr.f32.gmra.mrb[0].mxu0 %v56
  %v364 = vpop.f32.mrb[0].mxu0
  %v365 = vadd.f32 0.0, %v364
  %v366 = vpop.f32.mrb[0].mxu0
  %367 = vmatprep.mubr.f32.mxu0 0.0
  %368 = vmatmul.mubr.f32.gmra.mrb[0].mxu0 %v59
  %v369 = vpop.f32.mrb[0].mxu0
  %v370 = vadd.f32 0.0, %v369
  %v371 = vpop.f32.mrb[0].mxu0
  %372 = vmatprep.mubr.f32.mxu0 0.0
  %373 = vmatmul.mubr.f32.gmra.mrb[0].mxu0 %v62
  %v374 = vpop.f32.mrb[0].mxu0
  %v375 = vadd.f32 0.0, %v374
  %v376 = vpop.f32.mrb[0].mxu0
  %377 = vmatprep.mubr.f32.mxu0 0.0
  %378 = vmatmul.mubr.f32.gmra.mrb[0].mxu0 %v65
  %v379 = vpop.f32.mrb[0].mxu0
  %v380 = vadd.f32 0.0, %v379
  %v381 = vpop.f32.mrb[0].mxu0
  %382 = vmatprep.mubr.f32.mxu0 0.0
  %383 = vmatmul.mubr.f32.gmra.mrb[0].mxu0 %v68
  %v384 = vpop.f32.mrb[0].mxu0
  %v385 = vadd.f32 0.0, %v384
  %v386 = vpop.f32.mrb[0].mxu0
  %387 = vmatprep.mubr.f32.mxu0 0.0
  %388 = vmatmul.mubr.f32.gmra.mrb[0].mxu0 %v71
  %v389 = vpop.f32.mrb[0].mxu0
  %v390 = vadd.f32 0.0, %v389
  %v391 = vpop.f32.mrb[0].mxu0
  %392 = vmatprep.mubr.f32.mxu0 0.0
  %393 = vmatmul.mubr.f32.gmra.mrb[0].mxu0 %v74
  %v394 = vpop.f32.mrb[0].mxu0
  %v395 = vadd.f32 0.0, %v394
  %v396 = vpop.f32.mrb[0].mxu0
  %397 = vmatprep.mubr.f32.mxu0 0.0
  %398 = vmatmul.mubr.f32.gmra.mrb[0].mxu0 %v77
  %v399 = vpop.f32.mrb[0].mxu0
  %v400 = vadd.f32 0.0, %v399
  %v401 = vpop.f32.mrb[0].mxu0
  %402 = vmatprep.mubr.f32.mxu0 0.0
  %403 = vmatmul.mubr.f32.gmra.mrb[0].mxu0 %v80
  %v404 = vpop.f32.mrb[0].mxu0
  %v405 = vadd.f32 0.0, %v404
  %v406 = vpop.f32.mrb[0].mxu0
  %407 = vdwg.mxu0
  %vm408 = vcmask 15360
  %409 = vst.msk [vmem:[%s4] sm:$0xff] %vm408, %v330
  %410 = vst.msk [vmem:[%s4 + $0x8] sm:$0xff] %vm408, %v335
  %411 = vst.msk [vmem:[%s4 + $0x10] sm:$0xff] %vm408, %v340
  %412 = vst.msk [vmem:[%s4 + $0x18] sm:$0xff] %vm408, %v345
  %413 = vst.msk [vmem:[%s4 + $0x20] sm:$0xff] %vm408, %v350
  %414 = vst.msk [vmem:[%s4 + $0x28] sm:$0xff] %vm408, %v355
  %415 = vst.msk [vmem:[%s4 + $0x30] sm:$0xff] %vm408, %v360
  %416 = vst.msk [vmem:[%s4 + $0x38] sm:$0xff] %vm408, %v365
  %417 = vst.msk [vmem:[%s4 + $0x40] sm:$0xff] %vm408, %v370
  %418 = vst.msk [vmem:[%s4 + $0x48] sm:$0xff] %vm408, %v375
  %419 = vst.msk [vmem:[%s4 + $0x50] sm:$0xff] %vm408, %v380
  %420 = vst.msk [vmem:[%s4 + $0x58] sm:$0xff] %vm408, %v385
  %421 = vst.msk [vmem:[%s4 + $0x60] sm:$0xff] %vm408, %v390
  %422 = vst.msk [vmem:[%s4 + $0x68] sm:$0xff] %vm408, %v395
  %423 = vst.msk [vmem:[%s4 + $0x70] sm:$0xff] %vm408, %v400
  %424 = vst.msk [vmem:[%s4 + $0x78] sm:$0xff] %vm408, %v405
  // Predicated region
  $region14: #{sparse_gat_layer.3} parent=0 // pred_check
    _
  $region15: #{sparse_gat_layer.3} parent=0 // pred_check_branch
    %426 = sbr.rel (0) target = $region17
  $region16: #{sparse_gat_layer.3} parent=0 // pred_region
    _
  $region17: #{sparse_gat_layer.3} parent=0 // pred_fallthru
    _
  // Predicated region
  $region18: #{sparse_gat_layer.3} parent=0 // pred_check
    _
  $region19: #{sparse_gat_layer.3} parent=0 // pred_check_branch
    %428 = sbr.rel (0) target = $region21
  $region20: #{sparse_gat_layer.3} parent=0 // pred_region
    _
  $region21: #{sparse_gat_layer.3} parent=0 // pred_fallthru
    _
  // Predicated region
  $region22: #{sparse_gat_layer.3} parent=0 // pred_check
    _
  $region23: #{sparse_gat_layer.3} parent=0 // pred_check_branch
    %430 = sbr.rel (0) target = $region25
  $region24: #{sparse_gat_layer.3} parent=0 // pred_region
    _
  $region25: #{sparse_gat_layer.3} parent=0 // pred_fallthru
    _
  // Predicated region
  $region26: #{sparse_gat_layer.3} parent=0 // pred_check
    _
  $region27: #{sparse_gat_layer.3} parent=0 // pred_check_branch
    %432 = sbr.rel (0) target = $region29
  $region28: #{sparse_gat_layer.3} parent=0 // pred_region
    _
  $region29: #{sparse_gat_layer.3} parent=0 // pred_fallthru
    _

// kernel: sparse_gat_layer.5
$region0: #{sparse_gat_layer.5}
  #allocation0 [shape = 'u32[]', space=smem, size = 0x4, offset = 0x4, fixed_abs, tag = 'smem constant byte address 0x4 - core index']
  #allocation1 [shape = 'u32[144,128]{1,0:T(1,128)}', space=vmem, size = 0x12000, scoped, tag = 'internal scratch']
  #allocation2 [shape = 'f32[1,1]{1,0:T(1,128)S(6)}', space=smem, size = 0x200, scoped, tag = 'scoped memory for sparse_gat_layer.5']
  %s0 = inlined_call_operand.<no memory space> [shape: f32[1,1], index: 0, kind: input, shape index: {}]
  %s1 = inlined_call_operand.vmem [shape: f32[128,128], index: 1, kind: input, shape index: {}]
  %s2 = inlined_call_operand.vmem [shape: f32[128,1], index: 2, kind: input, shape index: {}]
  %s3 = inlined_call_operand.vmem [shape: f32[128,128], index: 3, kind: output, shape index: {}]
  %s4 = sld [smem:[#allocation0]]
  $region22: #{sparse_gat_layer.5} parent=0
    _
  %s6 = ssub.s32 1, %s4
  %s7 = scalar_select 0, %s6, %s4
  %8 = sst [smem:[#allocation2]] %s0
  // Predicated region
  $region2: #{sparse_gat_layer.5} parent=0 // pred_check
    _
  $region3: #{sparse_gat_layer.5} parent=0 // pred_check_branch
    %10 = sbr.rel (0) target = $region5
  $region4: #{sparse_gat_layer.5} parent=0 // pred_region
    _
  $region5: #{sparse_gat_layer.5} parent=0 // pred_fallthru
    _
  // Predicated region
  $region6: #{sparse_gat_layer.5} parent=0 // pred_check
    _
  $region7: #{sparse_gat_layer.5} parent=0 // pred_check_branch
    %12 = sbr.rel (0) target = $region9
  $region8: #{sparse_gat_layer.5} parent=0 // pred_region
    _
  $region9: #{sparse_gat_layer.5} parent=0 // pred_fallthru
    _
  // Predicated region
  $region10: #{sparse_gat_layer.5} parent=0 // pred_check
    _
  $region11: #{sparse_gat_layer.5} parent=0 // pred_check_branch
    %14 = sbr.rel (0) target = $region13
  $region12: #{sparse_gat_layer.5} parent=0 // pred_region
    _
  $region13: #{sparse_gat_layer.5} parent=0 // pred_fallthru
    _
  %s15 = sld [smem:[#allocation2]]
  %v16 = vld [vmem:[%s1] sm:$0xff]
  %v17 = vld [vmem:[%s1 + $0x8] sm:$0xff]
  %v18 = vld [vmem:[%s1 + $0x10] sm:$0xff]
  %v19 = vld [vmem:[%s1 + $0x18] sm:$0xff]
  %v20 = vld [vmem:[%s1 + $0x20] sm:$0xff]
  %v21 = vld [vmem:[%s1 + $0x28] sm:$0xff]
  %v22 = vld [vmem:[%s1 + $0x30] sm:$0xff]
  %v23 = vld [vmem:[%s1 + $0x38] sm:$0xff]
  %v24 = vld [vmem:[%s1 + $0x40] sm:$0xff]
  %v25 = vld [vmem:[%s1 + $0x48] sm:$0xff]
  %v26 = vld [vmem:[%s1 + $0x50] sm:$0xff]
  %v27 = vld [vmem:[%s1 + $0x58] sm:$0xff]
  %v28 = vld [vmem:[%s1 + $0x60] sm:$0xff]
  %v29 = vld [vmem:[%s1 + $0x68] sm:$0xff]
  %v30 = vld [vmem:[%s1 + $0x70] sm:$0xff]
  %v31 = vld [vmem:[%s1 + $0x78] sm:$0xff]
  %v32 = vld [vmem:[%s2] sm:$0xff]
  %v33 = vld [vmem:[%s2 + $0x8] sm:$0xff]
  %v34 = vld [vmem:[%s2 + $0x10] sm:$0xff]
  %v35 = vld [vmem:[%s2 + $0x18] sm:$0xff]
  %v36 = vld [vmem:[%s2 + $0x20] sm:$0xff]
  %v37 = vld [vmem:[%s2 + $0x28] sm:$0xff]
  %v38 = vld [vmem:[%s2 + $0x30] sm:$0xff]
  %v39 = vld [vmem:[%s2 + $0x38] sm:$0xff]
  %v40 = vld [vmem:[%s2 + $0x40] sm:$0xff]
  %v41 = vld [vmem:[%s2 + $0x48] sm:$0xff]
  %v42 = vld [vmem:[%s2 + $0x50] sm:$0xff]
  %v43 = vld [vmem:[%s2 + $0x58] sm:$0xff]
  %v44 = vld [vmem:[%s2 + $0x60] sm:$0xff]
  %v45 = vld [vmem:[%s2 + $0x68] sm:$0xff]
  %v46 = vld [vmem:[%s2 + $0x70] sm:$0xff]
  %v47 = vld [vmem:[%s2 + $0x78] sm:$0xff]
  %v48 = vstv %s15
  %v49 = vsub.f32 %v48, %v32
  %v50 = vsub.f32 %v48, %v33
  %v51 = vsub.f32 %v48, %v34
  %v52 = vsub.f32 %v48, %v35
  %v53 = vsub.f32 %v48, %v36
  %v54 = vsub.f32 %v48, %v37
  %v55 = vsub.f32 %v48, %v38
  %v56 = vsub.f32 %v48, %v39
  %v57 = vsub.f32 %v48, %v40
  %v58 = vsub.f32 %v48, %v41
  %v59 = vsub.f32 %v48, %v42
  %v60 = vsub.f32 %v48, %v43
  %v61 = vsub.f32 %v48, %v44
  %v62 = vsub.f32 %v48, %v45
  %v63 = vsub.f32 %v48, %v46
  %v64 = vsub.f32 %v48, %v47
  %v65 = vmin.f32 %v49, 80.0
  %v66 = vmin.f32 %v50, 80.0
  %v67 = vmin.f32 %v51, 80.0
  %v68 = vmin.f32 %v52, 80.0
  %v69 = vmin.f32 %v53, 80.0
  %v70 = vmin.f32 %v54, 80.0
  %v71 = vmin.f32 %v55, 80.0
  %v72 = vmin.f32 %v56, 80.0
  %v73 = vmin.f32 %v57, 80.0
  %v74 = vmin.f32 %v58, 80.0
  %v75 = vmin.f32 %v59, 80.0
  %v76 = vmin.f32 %v60, 80.0
  %v77 = vmin.f32 %v61, 80.0
  %v78 = vmin.f32 %v62, 80.0
  %v79 = vmin.f32 %v63, 80.0
  %v80 = vmin.f32 %v64, 80.0
  %v81 = vmul.f32 %v65, 1.442695
  %v82 = vpow.pop %v81
  %v83 = vmul.f32 %v66, 1.442695
  %v84 = vpow.pop %v83
  %v85 = vmul.f32 %v67, 1.442695
  %v86 = vpow.pop %v85
  %v87 = vmul.f32 %v68, 1.442695
  %v88 = vpow.pop %v87
  %v89 = vmul.f32 %v69, 1.442695
  %v90 = vpow.pop %v89
  %v91 = vmul.f32 %v70, 1.442695
  %v92 = vpow.pop %v91
  %v93 = vmul.f32 %v71, 1.442695
  %v94 = vpow.pop %v93
  %v95 = vmul.f32 %v72, 1.442695
  %v96 = vpow.pop %v95
  %v97 = vmul.f32 %v73, 1.442695
  %v98 = vpow.pop %v97
  %v99 = vmul.f32 %v74, 1.442695
  %v100 = vpow.pop %v99
  %v101 = vmul.f32 %v75, 1.442695
  %v102 = vpow.pop %v101
  %v103 = vmul.f32 %v76, 1.442695
  %v104 = vpow.pop %v103
  %v105 = vmul.f32 %v77, 1.442695
  %v106 = vpow.pop %v105
  %v107 = vmul.f32 %v78, 1.442695
  %v108 = vpow.pop %v107
  %v109 = vmul.f32 %v79, 1.442695
  %v110 = vpow.pop %v109
  %v111 = vmul.f32 %v80, 1.442695
  %v112 = vpow.pop %v111
  %v113 = vmul.f32 %v82, 9e-15
  %v114 = vmul.f32 %v84, 9e-15
  %v115 = vmul.f32 %v86, 9e-15
  %v116 = vmul.f32 %v88, 9e-15
  %v117 = vmul.f32 %v90, 9e-15
  %v118 = vmul.f32 %v92, 9e-15
  %v119 = vmul.f32 %v94, 9e-15
  %v120 = vmul.f32 %v96, 9e-15
  %v121 = vmul.f32 %v98, 9e-15
  %v122 = vmul.f32 %v100, 9e-15
  %v123 = vmul.f32 %v102, 9e-15
  %v124 = vmul.f32 %v104, 9e-15
  %v125 = vmul.f32 %v106, 9e-15
  %v126 = vmul.f32 %v108, 9e-15
  %v127 = vmul.f32 %v110, 9e-15
  %v128 = vmul.f32 %v112, 9e-15
  %v129 = vadd.f32 %v16, %v113
  %v130 = vadd.f32 %v17, %v114
  %v131 = vadd.f32 %v18, %v115
  %v132 = vadd.f32 %v19, %v116
  %v133 = vadd.f32 %v20, %v117
  %v134 = vadd.f32 %v21, %v118
  %v135 = vadd.f32 %v22, %v119
  %v136 = vadd.f32 %v23, %v120
  %v137 = vadd.f32 %v24, %v121
  %v138 = vadd.f32 %v25, %v122
  %v139 = vadd.f32 %v26, %v123
  %v140 = vadd.f32 %v27, %v124
  %v141 = vadd.f32 %v28, %v125
  %v142 = vadd.f32 %v29, %v126
  %v143 = vadd.f32 %v30, %v127
  %v144 = vadd.f32 %v31, %v128
  %146 = vset.pattern.permute.xlu0 0
  %147 = vperm.xlu0 %146, %v129
  %v148 = vpop.permute.xlu0 %147
  %151 = vset.pattern.permute.xlu0 0
  %152 = vperm.xlu0 %151, %v130
  %v153 = vpop.permute.xlu0 %152
  %156 = vset.pattern.permute.xlu0 0
  %157 = vperm.xlu0 %156, %v131
  %v158 = vpop.permute.xlu0 %157
  %161 = vset.pattern.permute.xlu0 0
  %162 = vperm.xlu0 %161, %v132
  %v163 = vpop.permute.xlu0 %162
  %166 = vset.pattern.permute.xlu0 0
  %167 = vperm.xlu0 %166, %v133
  %v168 = vpop.permute.xlu0 %167
  %171 = vset.pattern.permute.xlu0 0
  %172 = vperm.xlu0 %171, %v134
  %v173 = vpop.permute.xlu0 %172
  %176 = vset.pattern.permute.xlu0 0
  %177 = vperm.xlu0 %176, %v135
  %v178 = vpop.permute.xlu0 %177
  %181 = vset.pattern.permute.xlu0 0
  %182 = vperm.xlu0 %181, %v136
  %v183 = vpop.permute.xlu0 %182
  %186 = vset.pattern.permute.xlu0 0
  %187 = vperm.xlu0 %186, %v137
  %v188 = vpop.permute.xlu0 %187
  %191 = vset.pattern.permute.xlu0 0
  %192 = vperm.xlu0 %191, %v138
  %v193 = vpop.permute.xlu0 %192
  %196 = vset.pattern.permute.xlu0 0
  %197 = vperm.xlu0 %196, %v139
  %v198 = vpop.permute.xlu0 %197
  %201 = vset.pattern.permute.xlu0 0
  %202 = vperm.xlu0 %201, %v140
  %v203 = vpop.permute.xlu0 %202
  %206 = vset.pattern.permute.xlu0 0
  %207 = vperm.xlu0 %206, %v141
  %v208 = vpop.permute.xlu0 %207
  %211 = vset.pattern.permute.xlu0 0
  %212 = vperm.xlu0 %211, %v142
  %v213 = vpop.permute.xlu0 %212
  %216 = vset.pattern.permute.xlu0 0
  %217 = vperm.xlu0 %216, %v143
  %v218 = vpop.permute.xlu0 %217
  %221 = vset.pattern.permute.xlu0 0
  %222 = vperm.xlu0 %221, %v144
  %v223 = vpop.permute.xlu0 %222
  %v225 = vrcp.pop %v148
  %v226 = vmul.f32 %v16, %v225
  %v227 = vrcp.pop %v153
  %v228 = vmul.f32 %v17, %v227
  %v229 = vrcp.pop %v158
  %v230 = vmul.f32 %v18, %v229
  %v231 = vrcp.pop %v163
  %v232 = vmul.f32 %v19, %v231
  %v233 = vrcp.pop %v168
  %v234 = vmul.f32 %v20, %v233
  %v235 = vrcp.pop %v173
  %v236 = vmul.f32 %v21, %v235
  %v237 = vrcp.pop %v178
  %v238 = vmul.f32 %v22, %v237
  %v239 = vrcp.pop %v183
  %v240 = vmul.f32 %v23, %v239
  %v241 = vrcp.pop %v188
  %v242 = vmul.f32 %v24, %v241
  %v243 = vrcp.pop %v193
  %v244 = vmul.f32 %v25, %v243
  %v245 = vrcp.pop %v198
  %v246 = vmul.f32 %v26, %v245
  %v247 = vrcp.pop %v203
  %v248 = vmul.f32 %v27, %v247
  %v249 = vrcp.pop %v208
  %v250 = vmul.f32 %v28, %v249
  %v251 = vrcp.pop %v213
  %v252 = vmul.f32 %v29, %v251
  %v253 = vrcp.pop %v218
  %v254 = vmul.f32 %v30, %v253
  %v255 = vrcp.pop %v223
  %v256 = vmul.f32 %v31, %v255
  %257 = vst [vmem:[%s3] sm:$0xff] %v226
  %258 = vst [vmem:[%s3 + $0x8] sm:$0xff] %v228
  %259 = vst [vmem:[%s3 + $0x10] sm:$0xff] %v230
  %260 = vst [vmem:[%s3 + $0x18] sm:$0xff] %v232
  %261 = vst [vmem:[%s3 + $0x20] sm:$0xff] %v234
  %262 = vst [vmem:[%s3 + $0x28] sm:$0xff] %v236
  %263 = vst [vmem:[%s3 + $0x30] sm:$0xff] %v238
  %264 = vst [vmem:[%s3 + $0x38] sm:$0xff] %v240
  %265 = vst [vmem:[%s3 + $0x40] sm:$0xff] %v242
  %266 = vst [vmem:[%s3 + $0x48] sm:$0xff] %v244
  %267 = vst [vmem:[%s3 + $0x50] sm:$0xff] %v246
  %268 = vst [vmem:[%s3 + $0x58] sm:$0xff] %v248
  %269 = vst [vmem:[%s3 + $0x60] sm:$0xff] %v250
  %270 = vst [vmem:[%s3 + $0x68] sm:$0xff] %v252
  %271 = vst [vmem:[%s3 + $0x70] sm:$0xff] %v254
  %272 = vst [vmem:[%s3 + $0x78] sm:$0xff] %v256
  // Predicated region
  $region14: #{sparse_gat_layer.5} parent=0 // pred_check
    _
  $region15: #{sparse_gat_layer.5} parent=0 // pred_check_branch
    %274 = sbr.rel (0) target = $region17
  $region16: #{sparse_gat_layer.5} parent=0 // pred_region
    _
  $region17: #{sparse_gat_layer.5} parent=0 // pred_fallthru
    _
  // Predicated region
  $region18: #{sparse_gat_layer.5} parent=0 // pred_check
    _
  $region19: #{sparse_gat_layer.5} parent=0 // pred_check_branch
    %276 = sbr.rel (0) target = $region21
  $region20: #{sparse_gat_layer.5} parent=0 // pred_region
    _
  $region21: #{sparse_gat_layer.5} parent=0 // pred_fallthru
    _

// kernel: sparse_gat_layer.4
$region0: #{sparse_gat_layer.4}
  #allocation0 [shape = 'u32[]', space=smem, size = 0x4, offset = 0x4, fixed_abs, tag = 'smem constant byte address 0x4 - core index']
  #allocation1 [shape = 'u32[144,128]{1,0:T(1,128)}', space=vmem, size = 0x12000, scoped, tag = 'internal scratch']
  #allocation2 [shape = 'f32[128,1]{1,0:T(8,128)}', space=vmem, size = 0x10000, scoped, tag = 'scratch operand']
  #allocation3 [shape = 'f32[128,128]{1,0:T(8,128)}', space=vmem, size = 0x10000, scoped, tag = 'scratch operand']
  %s0 = inlined_call_operand.vmem [shape: f32[128,1], index: 0, kind: input, shape index: {}]
  %s1 = inlined_call_operand.vmem [shape: f32[1,128], index: 1, kind: input, shape index: {}]
  %s2 = inlined_call_operand.vmem [shape: s8[128,128], index: 2, kind: input, shape index: {}]
  %s3 = inlined_call_operand.vmem [shape: f32[128,128], index: 3, kind: input, shape index: {}]
  %s4 = inlined_call_operand.vmem [shape: f32[128,128], index: 4, kind: output, shape index: {0}]
  %s5 = inlined_call_operand.vmem [shape: f32[128,1], index: 5, kind: output, shape index: {1}]
  %6 = xla_tuple %s4, %s5
  %s7 = sld [smem:[#allocation0]]
  $region42: #{sparse_gat_layer.4} parent=0
    _
  %s9 = ssub.s32 1, %s7
  %s10 = scalar_select 0, %s9, %s7
  // Predicated region
  $region2: #{sparse_gat_layer.4} parent=0 // pred_check
    _
  $region3: #{sparse_gat_layer.4} parent=0 // pred_check_branch
    %12 = sbr.rel (0) target = $region5
  $region4: #{sparse_gat_layer.4} parent=0 // pred_region
    _
  $region5: #{sparse_gat_layer.4} parent=0 // pred_fallthru
    _
  // Predicated region
  $region6: #{sparse_gat_layer.4} parent=0 // pred_check
    _
  $region7: #{sparse_gat_layer.4} parent=0 // pred_check_branch
    %14 = sbr.rel (0) target = $region9
  $region8: #{sparse_gat_layer.4} parent=0 // pred_region
    _
  $region9: #{sparse_gat_layer.4} parent=0 // pred_fallthru
    _
  // Predicated region
  $region10: #{sparse_gat_layer.4} parent=0 // pred_check
    _
  $region11: #{sparse_gat_layer.4} parent=0 // pred_check_branch
    %16 = sbr.rel (0) target = $region13
  $region12: #{sparse_gat_layer.4} parent=0 // pred_region
    _
  $region13: #{sparse_gat_layer.4} parent=0 // pred_fallthru
    _
  // Predicated region
  $region14: #{sparse_gat_layer.4} parent=0 // pred_check
    _
  $region15: #{sparse_gat_layer.4} parent=0 // pred_check_branch
    %18 = sbr.rel (0) target = $region17
  $region16: #{sparse_gat_layer.4} parent=0 // pred_region
    _
  $region17: #{sparse_gat_layer.4} parent=0 // pred_fallthru
    _
  %p19 = scmp.eq.s32.totalorder 0, 0
  // Predicated region
  $region18: #{sparse_gat_layer.4} parent=0 // pred_check
    %p20 = pneg %p19
  $region19: #{sparse_gat_layer.4} parent=0 // pred_check_branch
    %22 = sbr.rel (%p20) target = $region21
  $region20: #{sparse_gat_layer.4} parent=0 // pred_region
    %vm23 = vcmask 7168
    %24 = vst.msk [vmem:[#allocation2] sm:$0xff] %vm23, -1e+30
    %25 = vst.msk [vmem:[#allocation2 + $0x8] sm:$0xff] %vm23, -1e+30
    %26 = vst.msk [vmem:[#allocation2 + $0x10] sm:$0xff] %vm23, -1e+30
    %27 = vst.msk [vmem:[#allocation2 + $0x18] sm:$0xff] %vm23, -1e+30
    %28 = vst.msk [vmem:[#allocation2 + $0x20] sm:$0xff] %vm23, -1e+30
    %29 = vst.msk [vmem:[#allocation2 + $0x28] sm:$0xff] %vm23, -1e+30
    %30 = vst.msk [vmem:[#allocation2 + $0x30] sm:$0xff] %vm23, -1e+30
    %31 = vst.msk [vmem:[#allocation2 + $0x38] sm:$0xff] %vm23, -1e+30
    %32 = vst.msk [vmem:[#allocation2 + $0x40] sm:$0xff] %vm23, -1e+30
    %33 = vst.msk [vmem:[#allocation2 + $0x48] sm:$0xff] %vm23, -1e+30
    %34 = vst.msk [vmem:[#allocation2 + $0x50] sm:$0xff] %vm23, -1e+30
    %35 = vst.msk [vmem:[#allocation2 + $0x58] sm:$0xff] %vm23, -1e+30
    %36 = vst.msk [vmem:[#allocation2 + $0x60] sm:$0xff] %vm23, -1e+30
    %37 = vst.msk [vmem:[#allocation2 + $0x68] sm:$0xff] %vm23, -1e+30
    %38 = vst.msk [vmem:[#allocation2 + $0x70] sm:$0xff] %vm23, -1e+30
    %39 = vst.msk [vmem:[#allocation2 + $0x78] sm:$0xff] %vm23, -1e+30
    %40 = vst [vmem:[#allocation3] sm:$0xff] 0.0
    %41 = vst [vmem:[#allocation3 + $0x8] sm:$0xff] 0.0
    %42 = vst [vmem:[#allocation3 + $0x10] sm:$0xff] 0.0
    %43 = vst [vmem:[#allocation3 + $0x18] sm:$0xff] 0.0
    %44 = vst [vmem:[#allocation3 + $0x20] sm:$0xff] 0.0
    %45 = vst [vmem:[#allocation3 + $0x28] sm:$0xff] 0.0
    %46 = vst [vmem:[#allocation3 + $0x30] sm:$0xff] 0.0
    %47 = vst [vmem:[#allocation3 + $0x38] sm:$0xff] 0.0
    %48 = vst [vmem:[#allocation3 + $0x40] sm:$0xff] 0.0
    %49 = vst [vmem:[#allocation3 + $0x48] sm:$0xff] 0.0
    %50 = vst [vmem:[#allocation3 + $0x50] sm:$0xff] 0.0
    %51 = vst [vmem:[#allocation3 + $0x58] sm:$0xff] 0.0
    %52 = vst [vmem:[#allocation3 + $0x60] sm:$0xff] 0.0
    %53 = vst [vmem:[#allocation3 + $0x68] sm:$0xff] 0.0
    %54 = vst [vmem:[#allocation3 + $0x70] sm:$0xff] 0.0
    %55 = vst [vmem:[#allocation3 + $0x78] sm:$0xff] 0.0
  $region21: #{sparse_gat_layer.4} parent=0 // pred_fallthru
    _
  %v56 = vld [vmem:[%s0] sm:$0xff]
  %v57 = vld [vmem:[%s0 + $0x8] sm:$0xff]
  %v58 = vld [vmem:[%s0 + $0x10] sm:$0xff]
  %v59 = vld [vmem:[%s0 + $0x18] sm:$0xff]
  %v60 = vld [vmem:[%s0 + $0x20] sm:$0xff]
  %v61 = vld [vmem:[%s0 + $0x28] sm:$0xff]
  %v62 = vld [vmem:[%s0 + $0x30] sm:$0xff]
  %v63 = vld [vmem:[%s0 + $0x38] sm:$0xff]
  %v64 = vld [vmem:[%s0 + $0x40] sm:$0xff]
  %v65 = vld [vmem:[%s0 + $0x48] sm:$0xff]
  %v66 = vld [vmem:[%s0 + $0x50] sm:$0xff]
  %v67 = vld [vmem:[%s0 + $0x58] sm:$0xff]
  %v68 = vld [vmem:[%s0 + $0x60] sm:$0xff]
  %v69 = vld [vmem:[%s0 + $0x68] sm:$0xff]
  %v70 = vld [vmem:[%s0 + $0x70] sm:$0xff]
  %v71 = vld [vmem:[%s0 + $0x78] sm:$0xff]
  %v72 = vld [vmem:[%s1] sm:$0x1]
  %74 = vset.pattern.permute.xlu0 0
  %75 = vperm.xlu0 %74, %v56
  %v76 = vpop.permute.xlu0 %75
  %79 = vset.pattern.permute.xlu0 0
  %80 = vperm.xlu0 %79, %v57
  %v81 = vpop.permute.xlu0 %80
  %84 = vset.pattern.permute.xlu0 0
  %85 = vperm.xlu0 %84, %v58
  %v86 = vpop.permute.xlu0 %85
  %89 = vset.pattern.permute.xlu0 0
  %90 = vperm.xlu0 %89, %v59
  %v91 = vpop.permute.xlu0 %90
  %94 = vset.pattern.permute.xlu0 0
  %95 = vperm.xlu0 %94, %v60
  %v96 = vpop.permute.xlu0 %95
  %99 = vset.pattern.permute.xlu0 0
  %100 = vperm.xlu0 %99, %v61
  %v101 = vpop.permute.xlu0 %100
  %104 = vset.pattern.permute.xlu0 0
  %105 = vperm.xlu0 %104, %v62
  %v106 = vpop.permute.xlu0 %105
  %109 = vset.pattern.permute.xlu0 0
  %110 = vperm.xlu0 %109, %v63
  %v111 = vpop.permute.xlu0 %110
  %114 = vset.pattern.permute.xlu0 0
  %115 = vperm.xlu0 %114, %v64
  %v116 = vpop.permute.xlu0 %115
  %119 = vset.pattern.permute.xlu0 0
  %120 = vperm.xlu0 %119, %v65
  %v121 = vpop.permute.xlu0 %120
  %124 = vset.pattern.permute.xlu0 0
  %125 = vperm.xlu0 %124, %v66
  %v126 = vpop.permute.xlu0 %125
  %129 = vset.pattern.permute.xlu0 0
  %130 = vperm.xlu0 %129, %v67
  %v131 = vpop.permute.xlu0 %130
  %134 = vset.pattern.permute.xlu0 0
  %135 = vperm.xlu0 %134, %v68
  %v136 = vpop.permute.xlu0 %135
  %139 = vset.pattern.permute.xlu0 0
  %140 = vperm.xlu0 %139, %v69
  %v141 = vpop.permute.xlu0 %140
  %144 = vset.pattern.permute.xlu0 0
  %145 = vperm.xlu0 %144, %v70
  %v146 = vpop.permute.xlu0 %145
  %149 = vset.pattern.permute.xlu0 0
  %150 = vperm.xlu0 %149, %v71
  %v151 = vpop.permute.xlu0 %150
  %v154 = vlaneseq
  %v155 = vshrl.u32 %v154, 7
  %v156 = vsub.s32 0, %v155
  %v157 = vrot.slane %v72, %v156
  %v159 = vadd.f32 %v76, %v157
  %v160 = vadd.f32 %v81, %v157
  %v161 = vadd.f32 %v86, %v157
  %v162 = vadd.f32 %v91, %v157
  %v163 = vadd.f32 %v96, %v157
  %v164 = vadd.f32 %v101, %v157
  %v165 = vadd.f32 %v106, %v157
  %v166 = vadd.f32 %v111, %v157
  %v167 = vadd.f32 %v116, %v157
  %v168 = vadd.f32 %v121, %v157
  %v169 = vadd.f32 %v126, %v157
  %v170 = vadd.f32 %v131, %v157
  %v171 = vadd.f32 %v136, %v157
  %v172 = vadd.f32 %v141, %v157
  %v173 = vadd.f32 %v146, %v157
  %v174 = vadd.f32 %v151, %v157
  %v175 = vmul.f32 %v159, 0.2
  %v176 = vmul.f32 %v160, 0.2
  %v177 = vmul.f32 %v161, 0.2
  %v178 = vmul.f32 %v162, 0.2
  %v179 = vmul.f32 %v163, 0.2
  %v180 = vmul.f32 %v164, 0.2
  %v181 = vmul.f32 %v165, 0.2
  %v182 = vmul.f32 %v166, 0.2
  %v183 = vmul.f32 %v167, 0.2
  %v184 = vmul.f32 %v168, 0.2
  %v185 = vmul.f32 %v169, 0.2
  %v186 = vmul.f32 %v170, 0.2
  %v187 = vmul.f32 %v171, 0.2
  %v188 = vmul.f32 %v172, 0.2
  %v189 = vmul.f32 %v173, 0.2
  %v190 = vmul.f32 %v174, 0.2
  %v191 = vmax.f32 %v159, %v175
  %v192 = vmax.f32 %v160, %v176
  %v193 = vmax.f32 %v161, %v177
  %v194 = vmax.f32 %v162, %v178
  %v195 = vmax.f32 %v163, %v179
  %v196 = vmax.f32 %v164, %v180
  %v197 = vmax.f32 %v165, %v181
  %v198 = vmax.f32 %v166, %v182
  %v199 = vmax.f32 %v167, %v183
  %v200 = vmax.f32 %v168, %v184
  %v201 = vmax.f32 %v169, %v185
  %v202 = vmax.f32 %v170, %v186
  %v203 = vmax.f32 %v171, %v187
  %v204 = vmax.f32 %v172, %v188
  %v205 = vmax.f32 %v173, %v189
  %v206 = vmax.f32 %v174, %v190
  %v207 = vld [vmem:[%s2] sm:$0xff]
  %v208 = vld [vmem:[%s2 + $0x8] sm:$0xff]
  %v209 = vld [vmem:[%s2 + $0x10] sm:$0xff]
  %v210 = vld [vmem:[%s2 + $0x18] sm:$0xff]
  %v211 = vunpack.c.0.s8 %v207
  %v212 = vunpack.c.1.s8 %v207
  %v213 = vunpack.c.2.s8 %v207
  %v214 = vunpack.c.3.s8 %v207
  %v215 = vunpack.c.0.s8 %v208
  %v216 = vunpack.c.1.s8 %v208
  %v217 = vunpack.c.2.s8 %v208
  %v218 = vunpack.c.3.s8 %v208
  %v219 = vunpack.c.0.s8 %v209
  %v220 = vunpack.c.1.s8 %v209
  %v221 = vunpack.c.2.s8 %v209
  %v222 = vunpack.c.3.s8 %v209
  %v223 = vunpack.c.0.s8 %v210
  %v224 = vunpack.c.1.s8 %v210
  %v225 = vunpack.c.2.s8 %v210
  %v226 = vunpack.c.3.s8 %v210
  %v227 = vcvt.s32.f32 %v211
  %v228 = vcvt.s32.f32 %v212
  %v229 = vcvt.s32.f32 %v213
  %v230 = vcvt.s32.f32 %v214
  %v231 = vcvt.s32.f32 %v215
  %v232 = vcvt.s32.f32 %v216
  %v233 = vcvt.s32.f32 %v217
  %v234 = vcvt.s32.f32 %v218
  %v235 = vcvt.s32.f32 %v219
  %v236 = vcvt.s32.f32 %v220
  %v237 = vcvt.s32.f32 %v221
  %v238 = vcvt.s32.f32 %v222
  %v239 = vcvt.s32.f32 %v223
  %v240 = vcvt.s32.f32 %v224
  %v241 = vcvt.s32.f32 %v225
  %v242 = vcvt.s32.f32 %v226
  %vm243 = vcmp.gt.f32.partialorder %v227, 0.0
  %vm244 = vcmp.gt.f32.partialorder %v228, 0.0
  %vm245 = vcmp.gt.f32.partialorder %v229, 0.0
  %vm246 = vcmp.gt.f32.partialorder %v230, 0.0
  %vm247 = vcmp.gt.f32.partialorder %v231, 0.0
  %vm248 = vcmp.gt.f32.partialorder %v232, 0.0
  %vm249 = vcmp.gt.f32.partialorder %v233, 0.0
  %vm250 = vcmp.gt.f32.partialorder %v234, 0.0
  %vm251 = vcmp.gt.f32.partialorder %v235, 0.0
  %vm252 = vcmp.gt.f32.partialorder %v236, 0.0
  %vm253 = vcmp.gt.f32.partialorder %v237, 0.0
  %vm254 = vcmp.gt.f32.partialorder %v238, 0.0
  %vm255 = vcmp.gt.f32.partialorder %v239, 0.0
  %vm256 = vcmp.gt.f32.partialorder %v240, 0.0
  %vm257 = vcmp.gt.f32.partialorder %v241, 0.0
  %vm258 = vcmp.gt.f32.partialorder %v242, 0.0
  %v259 = vsel %vm243, %v191, -1e+30
  %v260 = vsel %vm244, %v192, -1e+30
  %v261 = vsel %vm245, %v193, -1e+30
  %v262 = vsel %vm246, %v194, -1e+30
  %v263 = vsel %vm247, %v195, -1e+30
  %v264 = vsel %vm248, %v196, -1e+30
  %v265 = vsel %vm249, %v197, -1e+30
  %v266 = vsel %vm250, %v198, -1e+30
  %v267 = vsel %vm251, %v199, -1e+30
  %v268 = vsel %vm252, %v200, -1e+30
  %v269 = vsel %vm253, %v201, -1e+30
  %v270 = vsel %vm254, %v202, -1e+30
  %v271 = vsel %vm255, %v203, -1e+30
  %v272 = vsel %vm256, %v204, -1e+30
  %v273 = vsel %vm257, %v205, -1e+30
  %v274 = vsel %vm258, %v206, -1e+30
  %v275 = vld [vmem:[#allocation2] sm:$0xff]
  %v276 = vld [vmem:[#allocation2 + $0x8] sm:$0xff]
  %v277 = vld [vmem:[#allocation2 + $0x10] sm:$0xff]
  %v278 = vld [vmem:[#allocation2 + $0x18] sm:$0xff]
  %v279 = vld [vmem:[#allocation2 + $0x20] sm:$0xff]
  %v280 = vld [vmem:[#allocation2 + $0x28] sm:$0xff]
  %v281 = vld [vmem:[#allocation2 + $0x30] sm:$0xff]
  %v282 = vld [vmem:[#allocation2 + $0x38] sm:$0xff]
  %v283 = vld [vmem:[#allocation2 + $0x40] sm:$0xff]
  %v284 = vld [vmem:[#allocation2 + $0x48] sm:$0xff]
  %v285 = vld [vmem:[#allocation2 + $0x50] sm:$0xff]
  %v286 = vld [vmem:[#allocation2 + $0x58] sm:$0xff]
  %v287 = vld [vmem:[#allocation2 + $0x60] sm:$0xff]
  %v288 = vld [vmem:[#allocation2 + $0x68] sm:$0xff]
  %v289 = vld [vmem:[#allocation2 + $0x70] sm:$0xff]
  %v290 = vld [vmem:[#allocation2 + $0x78] sm:$0xff]
  %291 = vmax.xlane.f32.xlu0 %v259
  %v292 = vpop.xlane.xlu0 %291
  %293 = vmax.xlane.f32.xlu0 %v260
  %v294 = vpop.xlane.xlu0 %293
  %295 = vmax.xlane.f32.xlu0 %v261
  %v296 = vpop.xlane.xlu0 %295
  %297 = vmax.xlane.f32.xlu0 %v262
  %v298 = vpop.xlane.xlu0 %297
  %299 = vmax.xlane.f32.xlu0 %v263
  %v300 = vpop.xlane.xlu0 %299
  %301 = vmax.xlane.f32.xlu0 %v264
  %v302 = vpop.xlane.xlu0 %301
  %303 = vmax.xlane.f32.xlu0 %v265
  %v304 = vpop.xlane.xlu0 %303
  %305 = vmax.xlane.f32.xlu0 %v266
  %v306 = vpop.xlane.xlu0 %305
  %307 = vmax.xlane.f32.xlu0 %v267
  %v308 = vpop.xlane.xlu0 %307
  %309 = vmax.xlane.f32.xlu0 %v268
  %v310 = vpop.xlane.xlu0 %309
  %311 = vmax.xlane.f32.xlu0 %v269
  %v312 = vpop.xlane.xlu0 %311
  %313 = vmax.xlane.f32.xlu0 %v270
  %v314 = vpop.xlane.xlu0 %313
  %315 = vmax.xlane.f32.xlu0 %v271
  %v316 = vpop.xlane.xlu0 %315
  %317 = vmax.xlane.f32.xlu0 %v272
  %v318 = vpop.xlane.xlu0 %317
  %319 = vmax.xlane.f32.xlu0 %v273
  %v320 = vpop.xlane.xlu0 %319
  %321 = vmax.xlane.f32.xlu0 %v274
  %v322 = vpop.xlane.xlu0 %321
  %v323 = vmax.f32 %v275, %v292
  %v324 = vmax.f32 %v276, %v294
  %v325 = vmax.f32 %v277, %v296
  %v326 = vmax.f32 %v278, %v298
  %v327 = vmax.f32 %v279, %v300
  %v328 = vmax.f32 %v280, %v302
  %v329 = vmax.f32 %v281, %v304
  %v330 = vmax.f32 %v282, %v306
  %v331 = vmax.f32 %v283, %v308
  %v332 = vmax.f32 %v284, %v310
  %v333 = vmax.f32 %v285, %v312
  %v334 = vmax.f32 %v286, %v314
  %v335 = vmax.f32 %v287, %v316
  %v336 = vmax.f32 %v288, %v318
  %v337 = vmax.f32 %v289, %v320
  %v338 = vmax.f32 %v290, %v322
  %v339 = vsub.f32 %v275, %v323
  %v340 = vsub.f32 %v276, %v324
  %v341 = vsub.f32 %v277, %v325
  %v342 = vsub.f32 %v278, %v326
  %v343 = vsub.f32 %v279, %v327
  %v344 = vsub.f32 %v280, %v328
  %v345 = vsub.f32 %v281, %v329
  %v346 = vsub.f32 %v282, %v330
  %v347 = vsub.f32 %v283, %v331
  %v348 = vsub.f32 %v284, %v332
  %v349 = vsub.f32 %v285, %v333
  %v350 = vsub.f32 %v286, %v334
  %v351 = vsub.f32 %v287, %v335
  %v352 = vsub.f32 %v288, %v336
  %v353 = vsub.f32 %v289, %v337
  %v354 = vsub.f32 %v290, %v338
  %v355 = vmul.f32 %v339, 1.442695
  %v356 = vpow.pop %v355
  %v357 = vmul.f32 %v340, 1.442695
  %v358 = vpow.pop %v357
  %v359 = vmul.f32 %v341, 1.442695
  %v360 = vpow.pop %v359
  %v361 = vmul.f32 %v342, 1.442695
  %v362 = vpow.pop %v361
  %v363 = vmul.f32 %v343, 1.442695
  %v364 = vpow.pop %v363
  %v365 = vmul.f32 %v344, 1.442695
  %v366 = vpow.pop %v365
  %v367 = vmul.f32 %v345, 1.442695
  %v368 = vpow.pop %v367
  %v369 = vmul.f32 %v346, 1.442695
  %v370 = vpow.pop %v369
  %v371 = vmul.f32 %v347, 1.442695
  %v372 = vpow.pop %v371
  %v373 = vmul.f32 %v348, 1.442695
  %v374 = vpow.pop %v373
  %v375 = vmul.f32 %v349, 1.442695
  %v376 = vpow.pop %v375
  %v377 = vmul.f32 %v350, 1.442695
  %v378 = vpow.pop %v377
  %v379 = vmul.f32 %v351, 1.442695
  %v380 = vpow.pop %v379
  %v381 = vmul.f32 %v352, 1.442695
  %v382 = vpow.pop %v381
  %v383 = vmul.f32 %v353, 1.442695
  %v384 = vpow.pop %v383
  %v385 = vmul.f32 %v354, 1.442695
  %v386 = vpow.pop %v385
  %388 = vset.pattern.permute.xlu0 0
  %389 = vperm.xlu0 %388, %v323
  %v390 = vpop.permute.xlu0 %389
  %393 = vset.pattern.permute.xlu0 0
  %394 = vperm.xlu0 %393, %v324
  %v395 = vpop.permute.xlu0 %394
  %398 = vset.pattern.permute.xlu0 0
  %399 = vperm.xlu0 %398, %v325
  %v400 = vpop.permute.xlu0 %399
  %403 = vset.pattern.permute.xlu0 0
  %404 = vperm.xlu0 %403, %v326
  %v405 = vpop.permute.xlu0 %404
  %408 = vset.pattern.permute.xlu0 0
  %409 = vperm.xlu0 %408, %v327
  %v410 = vpop.permute.xlu0 %409
  %413 = vset.pattern.permute.xlu0 0
  %414 = vperm.xlu0 %413, %v328
  %v415 = vpop.permute.xlu0 %414
  %418 = vset.pattern.permute.xlu0 0
  %419 = vperm.xlu0 %418, %v329
  %v420 = vpop.permute.xlu0 %419
  %423 = vset.pattern.permute.xlu0 0
  %424 = vperm.xlu0 %423, %v330
  %v425 = vpop.permute.xlu0 %424
  %428 = vset.pattern.permute.xlu0 0
  %429 = vperm.xlu0 %428, %v331
  %v430 = vpop.permute.xlu0 %429
  %433 = vset.pattern.permute.xlu0 0
  %434 = vperm.xlu0 %433, %v332
  %v435 = vpop.permute.xlu0 %434
  %438 = vset.pattern.permute.xlu0 0
  %439 = vperm.xlu0 %438, %v333
  %v440 = vpop.permute.xlu0 %439
  %443 = vset.pattern.permute.xlu0 0
  %444 = vperm.xlu0 %443, %v334
  %v445 = vpop.permute.xlu0 %444
  %448 = vset.pattern.permute.xlu0 0
  %449 = vperm.xlu0 %448, %v335
  %v450 = vpop.permute.xlu0 %449
  %453 = vset.pattern.permute.xlu0 0
  %454 = vperm.xlu0 %453, %v336
  %v455 = vpop.permute.xlu0 %454
  %458 = vset.pattern.permute.xlu0 0
  %459 = vperm.xlu0 %458, %v337
  %v460 = vpop.permute.xlu0 %459
  %463 = vset.pattern.permute.xlu0 0
  %464 = vperm.xlu0 %463, %v338
  %v465 = vpop.permute.xlu0 %464
  %v467 = vsub.f32 %v191, %v390
  %v468 = vsub.f32 %v192, %v395
  %v469 = vsub.f32 %v193, %v400
  %v470 = vsub.f32 %v194, %v405
  %v471 = vsub.f32 %v195, %v410
  %v472 = vsub.f32 %v196, %v415
  %v473 = vsub.f32 %v197, %v420
  %v474 = vsub.f32 %v198, %v425
  %v475 = vsub.f32 %v199, %v430
  %v476 = vsub.f32 %v200, %v435
  %v477 = vsub.f32 %v201, %v440
  %v478 = vsub.f32 %v202, %v445
  %v479 = vsub.f32 %v203, %v450
  %v480 = vsub.f32 %v204, %v455
  %v481 = vsub.f32 %v205, %v460
  %v482 = vsub.f32 %v206, %v465
  %v483 = vmin.f32 %v467, 0.0
  %v484 = vmin.f32 %v468, 0.0
  %v485 = vmin.f32 %v469, 0.0
  %v486 = vmin.f32 %v470, 0.0
  %v487 = vmin.f32 %v471, 0.0
  %v488 = vmin.f32 %v472, 0.0
  %v489 = vmin.f32 %v473, 0.0
  %v490 = vmin.f32 %v474, 0.0
  %v491 = vmin.f32 %v475, 0.0
  %v492 = vmin.f32 %v476, 0.0
  %v493 = vmin.f32 %v477, 0.0
  %v494 = vmin.f32 %v478, 0.0
  %v495 = vmin.f32 %v479, 0.0
  %v496 = vmin.f32 %v480, 0.0
  %v497 = vmin.f32 %v481, 0.0
  %v498 = vmin.f32 %v482, 0.0
  %v499 = vmul.f32 %v483, 1.442695
  %v500 = vpow.pop %v499
  %v501 = vmul.f32 %v484, 1.442695
  %v502 = vpow.pop %v501
  %v503 = vmul.f32 %v485, 1.442695
  %v504 = vpow.pop %v503
  %v505 = vmul.f32 %v486, 1.442695
  %v506 = vpow.pop %v505
  %v507 = vmul.f32 %v487, 1.442695
  %v508 = vpow.pop %v507
  %v509 = vmul.f32 %v488, 1.442695
  %v510 = vpow.pop %v509
  %v511 = vmul.f32 %v489, 1.442695
  %v512 = vpow.pop %v511
  %v513 = vmul.f32 %v490, 1.442695
  %v514 = vpow.pop %v513
  %v515 = vmul.f32 %v491, 1.442695
  %v516 = vpow.pop %v515
  %v517 = vmul.f32 %v492, 1.442695
  %v518 = vpow.pop %v517
  %v519 = vmul.f32 %v493, 1.442695
  %v520 = vpow.pop %v519
  %v521 = vmul.f32 %v494, 1.442695
  %v522 = vpow.pop %v521
  %v523 = vmul.f32 %v495, 1.442695
  %v524 = vpow.pop %v523
  %v525 = vmul.f32 %v496, 1.442695
  %v526 = vpow.pop %v525
  %v527 = vmul.f32 %v497, 1.442695
  %v528 = vpow.pop %v527
  %v529 = vmul.f32 %v498, 1.442695
  %v530 = vpow.pop %v529
  %v531 = vmul.f32 %v227, %v500
  %v532 = vmul.f32 %v228, %v502
  %v533 = vmul.f32 %v229, %v504
  %v534 = vmul.f32 %v230, %v506
  %v535 = vmul.f32 %v231, %v508
  %v536 = vmul.f32 %v232, %v510
  %v537 = vmul.f32 %v233, %v512
  %v538 = vmul.f32 %v234, %v514
  %v539 = vmul.f32 %v235, %v516
  %v540 = vmul.f32 %v236, %v518
  %v541 = vmul.f32 %v237, %v520
  %v542 = vmul.f32 %v238, %v522
  %v543 = vmul.f32 %v239, %v524
  %v544 = vmul.f32 %v240, %v526
  %v545 = vmul.f32 %v241, %v528
  %v546 = vmul.f32 %v242, %v530
  %v547 = vld [vmem:[#allocation3] sm:$0xff]
  %v548 = vld [vmem:[#allocation3 + $0x8] sm:$0xff]
  %v549 = vld [vmem:[#allocation3 + $0x10] sm:$0xff]
  %v550 = vld [vmem:[#allocation3 + $0x18] sm:$0xff]
  %v551 = vld [vmem:[#allocation3 + $0x20] sm:$0xff]
  %v552 = vld [vmem:[#allocation3 + $0x28] sm:$0xff]
  %v553 = vld [vmem:[#allocation3 + $0x30] sm:$0xff]
  %v554 = vld [vmem:[#allocation3 + $0x38] sm:$0xff]
  %v555 = vld [vmem:[#allocation3 + $0x40] sm:$0xff]
  %v556 = vld [vmem:[#allocation3 + $0x48] sm:$0xff]
  %v557 = vld [vmem:[#allocation3 + $0x50] sm:$0xff]
  %v558 = vld [vmem:[#allocation3 + $0x58] sm:$0xff]
  %v559 = vld [vmem:[#allocation3 + $0x60] sm:$0xff]
  %v560 = vld [vmem:[#allocation3 + $0x68] sm:$0xff]
  %v561 = vld [vmem:[#allocation3 + $0x70] sm:$0xff]
  %v562 = vld [vmem:[#allocation3 + $0x78] sm:$0xff]
  %564 = vset.pattern.permute.xlu0 0
  %565 = vperm.xlu0 %564, %v356
  %v566 = vpop.permute.xlu0 %565
  %569 = vset.pattern.permute.xlu0 0
  %570 = vperm.xlu0 %569, %v358
  %v571 = vpop.permute.xlu0 %570
  %574 = vset.pattern.permute.xlu0 0
  %575 = vperm.xlu0 %574, %v360
  %v576 = vpop.permute.xlu0 %575
  %579 = vset.pattern.permute.xlu0 0
  %580 = vperm.xlu0 %579, %v362
  %v581 = vpop.permute.xlu0 %580
  %584 = vset.pattern.permute.xlu0 0
  %585 = vperm.xlu0 %584, %v364
  %v586 = vpop.permute.xlu0 %585
  %589 = vset.pattern.permute.xlu0 0
  %590 = vperm.xlu0 %589, %v366
  %v591 = vpop.permute.xlu0 %590
  %594 = vset.pattern.permute.xlu0 0
  %595 = vperm.xlu0 %594, %v368
  %v596 = vpop.permute.xlu0 %595
  %599 = vset.pattern.permute.xlu0 0
  %600 = vperm.xlu0 %599, %v370
  %v601 = vpop.permute.xlu0 %600
  %604 = vset.pattern.permute.xlu0 0
  %605 = vperm.xlu0 %604, %v372
  %v606 = vpop.permute.xlu0 %605
  %609 = vset.pattern.permute.xlu0 0
  %610 = vperm.xlu0 %609, %v374
  %v611 = vpop.permute.xlu0 %610
  %614 = vset.pattern.permute.xlu0 0
  %615 = vperm.xlu0 %614, %v376
  %v616 = vpop.permute.xlu0 %615
  %619 = vset.pattern.permute.xlu0 0
  %620 = vperm.xlu0 %619, %v378
  %v621 = vpop.permute.xlu0 %620
  %624 = vset.pattern.permute.xlu0 0
  %625 = vperm.xlu0 %624, %v380
  %v626 = vpop.permute.xlu0 %625
  %629 = vset.pattern.permute.xlu0 0
  %630 = vperm.xlu0 %629, %v382
  %v631 = vpop.permute.xlu0 %630
  %634 = vset.pattern.permute.xlu0 0
  %635 = vperm.xlu0 %634, %v384
  %v636 = vpop.permute.xlu0 %635
  %639 = vset.pattern.permute.xlu0 0
  %640 = vperm.xlu0 %639, %v386
  %v641 = vpop.permute.xlu0 %640
  %v643 = vmul.f32 %v566, %v547
  %v644 = vmul.f32 %v571, %v548
  %v645 = vmul.f32 %v576, %v549
  %v646 = vmul.f32 %v581, %v550
  %v647 = vmul.f32 %v586, %v551
  %v648 = vmul.f32 %v591, %v552
  %v649 = vmul.f32 %v596, %v553
  %v650 = vmul.f32 %v601, %v554
  %v651 = vmul.f32 %v606, %v555
  %v652 = vmul.f32 %v611, %v556
  %v653 = vmul.f32 %v616, %v557
  %v654 = vmul.f32 %v621, %v558
  %v655 = vmul.f32 %v626, %v559
  %v656 = vmul.f32 %v631, %v560
  %v657 = vmul.f32 %v636, %v561
  %v658 = vmul.f32 %v641, %v562
  %v659 = vld [vmem:[%s3] sm:$0xff]
  %v660 = vld [vmem:[%s3 + $0x8] sm:$0xff]
  %v661 = vld [vmem:[%s3 + $0x10] sm:$0xff]
  %v662 = vld [vmem:[%s3 + $0x18] sm:$0xff]
  %v663 = vld [vmem:[%s3 + $0x20] sm:$0xff]
  %v664 = vld [vmem:[%s3 + $0x28] sm:$0xff]
  %v665 = vld [vmem:[%s3 + $0x30] sm:$0xff]
  %v666 = vld [vmem:[%s3 + $0x38] sm:$0xff]
  %v667 = vld [vmem:[%s3 + $0x40] sm:$0xff]
  %v668 = vld [vmem:[%s3 + $0x48] sm:$0xff]
  %v669 = vld [vmem:[%s3 + $0x50] sm:$0xff]
  %v670 = vld [vmem:[%s3 + $0x58] sm:$0xff]
  %v671 = vld [vmem:[%s3 + $0x60] sm:$0xff]
  %v672 = vld [vmem:[%s3 + $0x68] sm:$0xff]
  %v673 = vld [vmem:[%s3 + $0x70] sm:$0xff]
  %v674 = vld [vmem:[%s3 + $0x78] sm:$0xff]
  %675 = vmatprep.subr.mxu0 0.0
  %676 = vmatpush1.msra.mxu0 %v659
  %677 = vmatprep.subr.mxu0 0.0
  %678 = vmatpush1.msra.mxu0 %v660
  %679 = vmatprep.subr.mxu0 0.0
  %680 = vmatpush1.msra.mxu0 %v661
  %681 = vmatprep.subr.mxu0 0.0
  %682 = vmatpush1.msra.mxu0 %v662
  %683 = vmatprep.subr.mxu0 0.0
  %684 = vmatpush1.msra.mxu0 %v663
  %685 = vmatprep.subr.mxu0 0.0
  %686 = vmatpush1.msra.mxu0 %v664
  %687 = vmatprep.subr.mxu0 0.0
  %688 = vmatpush1.msra.mxu0 %v665
  %689 = vmatprep.subr.mxu0 0.0
  %690 = vmatpush1.msra.mxu0 %v666
  %691 = vmatprep.subr.mxu0 0.0
  %692 = vmatpush1.msra.mxu0 %v667
  %693 = vmatprep.subr.mxu0 0.0
  %694 = vmatpush1.msra.mxu0 %v668
  %695 = vmatprep.subr.mxu0 0.0
  %696 = vmatpush1.msra.mxu0 %v669
  %697 = vmatprep.subr.mxu0 0.0
  %698 = vmatpush1.msra.mxu0 %v670
  %699 = vmatprep.subr.mxu0 0.0
  %700 = vmatpush1.msra.mxu0 %v671
  %701 = vmatprep.subr.mxu0 0.0
  %702 = vmatpush1.msra.mxu0 %v672
  %703 = vmatprep.subr.mxu0 0.0
  %704 = vmatpush1.msra.mxu0 %v673
  %705 = vmatprep.subr.mxu0 0.0
  %706 = vmatpush1.msra.mxu0 %v674
  %707 = vmatprep.subr.mxu0 0.0
  %708 = vmatpush1.msra.mxu0 0.0
  %709 = vmatprep.subr.mxu0 0.0
  %710 = vmatpush1.msra.mxu0 0.0
  %711 = vmatprep.subr.mxu0 0.0
  %712 = vmatpush1.msra.mxu0 0.0
  %713 = vmatprep.subr.mxu0 0.0
  %714 = vmatpush1.msra.mxu0 0.0
  %715 = vmatprep.subr.mxu0 0.0
  %716 = vmatpush1.msra.mxu0 0.0
  %717 = vmatprep.subr.mxu0 0.0
  %718 = vmatpush1.msra.mxu0 0.0
  %719 = vmatprep.subr.mxu0 0.0
  %720 = vmatpush1.msra.mxu0 0.0
  %721 = vmatprep.subr.mxu0 0.0
  %722 = vmatpush1.msra.mxu0 0.0
  %723 = vmatprep.subr.mxu0 0.0
  %724 = vmatpush1.msra.mxu0 0.0
  %725 = vmatprep.subr.mxu0 0.0
  %726 = vmatpush1.msra.mxu0 0.0
  %727 = vmatprep.subr.mxu0 0.0
  %728 = vmatpush1.msra.mxu0 0.0
  %729 = vmatprep.subr.mxu0 0.0
  %730 = vmatpush1.msra.mxu0 0.0
  %731 = vmatprep.subr.mxu0 0.0
  %732 = vmatpush1.msra.mxu0 0.0
  %733 = vmatprep.subr.mxu0 0.0
  %734 = vmatpush1.msra.mxu0 0.0
  %735 = vmatprep.subr.mxu0 0.0
  %736 = vmatpush1.msra.mxu0 0.0
  %737 = vmatprep.subr.mxu0 0.0
  %738 = vmatpush1.msra.mxu0 0.0
  %739 = vmatprep.mubr.f32.mxu0 0.0
  %740 = vmatmul.mubr.f32.gmra.mrb[0].mxu0 %v531
  %v741 = vpop.f32.mrb[0].mxu0
  %v742 = vadd.f32 0.0, %v741
  %v743 = vpop.f32.mrb[0].mxu0
  %744 = vmatprep.mubr.f32.mxu0 0.0
  %745 = vmatmul.mubr.f32.gmra.mrb[0].mxu0 %v532
  %v746 = vpop.f32.mrb[0].mxu0
  %v747 = vadd.f32 0.0, %v746
  %v748 = vpop.f32.mrb[0].mxu0
  %749 = vmatprep.mubr.f32.mxu0 0.0
  %750 = vmatmul.mubr.f32.gmra.mrb[0].mxu0 %v533
  %v751 = vpop.f32.mrb[0].mxu0
  %v752 = vadd.f32 0.0, %v751
  %v753 = vpop.f32.mrb[0].mxu0
  %754 = vmatprep.mubr.f32.mxu0 0.0
  %755 = vmatmul.mubr.f32.gmra.mrb[0].mxu0 %v534
  %v756 = vpop.f32.mrb[0].mxu0
  %v757 = vadd.f32 0.0, %v756
  %v758 = vpop.f32.mrb[0].mxu0
  %759 = vmatprep.mubr.f32.mxu0 0.0
  %760 = vmatmul.mubr.f32.gmra.mrb[0].mxu0 %v535
  %v761 = vpop.f32.mrb[0].mxu0
  %v762 = vadd.f32 0.0, %v761
  %v763 = vpop.f32.mrb[0].mxu0
  %764 = vmatprep.mubr.f32.mxu0 0.0
  %765 = vmatmul.mubr.f32.gmra.mrb[0].mxu0 %v536
  %v766 = vpop.f32.mrb[0].mxu0
  %v767 = vadd.f32 0.0, %v766
  %v768 = vpop.f32.mrb[0].mxu0
  %769 = vmatprep.mubr.f32.mxu0 0.0
  %770 = vmatmul.mubr.f32.gmra.mrb[0].mxu0 %v537
  %v771 = vpop.f32.mrb[0].mxu0
  %v772 = vadd.f32 0.0, %v771
  %v773 = vpop.f32.mrb[0].mxu0
  %774 = vmatprep.mubr.f32.mxu0 0.0
  %775 = vmatmul.mubr.f32.gmra.mrb[0].mxu0 %v538
  %v776 = vpop.f32.mrb[0].mxu0
  %v777 = vadd.f32 0.0, %v776
  %v778 = vpop.f32.mrb[0].mxu0
  %779 = vmatprep.mubr.f32.mxu0 0.0
  %780 = vmatmul.mubr.f32.gmra.mrb[0].mxu0 %v539
  %v781 = vpop.f32.mrb[0].mxu0
  %v782 = vadd.f32 0.0, %v781
  %v783 = vpop.f32.mrb[0].mxu0
  %784 = vmatprep.mubr.f32.mxu0 0.0
  %785 = vmatmul.mubr.f32.gmra.mrb[0].mxu0 %v540
  %v786 = vpop.f32.mrb[0].mxu0
  %v787 = vadd.f32 0.0, %v786
  %v788 = vpop.f32.mrb[0].mxu0
  %789 = vmatprep.mubr.f32.mxu0 0.0
  %790 = vmatmul.mubr.f32.gmra.mrb[0].mxu0 %v541
  %v791 = vpop.f32.mrb[0].mxu0
  %v792 = vadd.f32 0.0, %v791
  %v793 = vpop.f32.mrb[0].mxu0
  %794 = vmatprep.mubr.f32.mxu0 0.0
  %795 = vmatmul.mubr.f32.gmra.mrb[0].mxu0 %v542
  %v796 = vpop.f32.mrb[0].mxu0
  %v797 = vadd.f32 0.0, %v796
  %v798 = vpop.f32.mrb[0].mxu0
  %799 = vmatprep.mubr.f32.mxu0 0.0
  %800 = vmatmul.mubr.f32.gmra.mrb[0].mxu0 %v543
  %v801 = vpop.f32.mrb[0].mxu0
  %v802 = vadd.f32 0.0, %v801
  %v803 = vpop.f32.mrb[0].mxu0
  %804 = vmatprep.mubr.f32.mxu0 0.0
  %805 = vmatmul.mubr.f32.gmra.mrb[0].mxu0 %v544
  %v806 = vpop.f32.mrb[0].mxu0
  %v807 = vadd.f32 0.0, %v806
  %v808 = vpop.f32.mrb[0].mxu0
  %809 = vmatprep.mubr.f32.mxu0 0.0
  %810 = vmatmul.mubr.f32.gmra.mrb[0].mxu0 %v545
  %v811 = vpop.f32.mrb[0].mxu0
  %v812 = vadd.f32 0.0, %v811
  %v813 = vpop.f32.mrb[0].mxu0
  %814 = vmatprep.mubr.f32.mxu0 0.0
  %815 = vmatmul.mubr.f32.gmra.mrb[0].mxu0 %v546
  %v816 = vpop.f32.mrb[0].mxu0
  %v817 = vadd.f32 0.0, %v816
  %v818 = vpop.f32.mrb[0].mxu0
  %819 = vdwg.mxu0
  %v820 = vadd.f32 %v643, %v742
  %v821 = vadd.f32 %v644, %v747
  %v822 = vadd.f32 %v645, %v752
  %v823 = vadd.f32 %v646, %v757
  %v824 = vadd.f32 %v647, %v762
  %v825 = vadd.f32 %v648, %v767
  %v826 = vadd.f32 %v649, %v772
  %v827 = vadd.f32 %v650, %v777
  %v828 = vadd.f32 %v651, %v782
  %v829 = vadd.f32 %v652, %v787
  %v830 = vadd.f32 %v653, %v792
  %v831 = vadd.f32 %v654, %v797
  %v832 = vadd.f32 %v655, %v802
  %v833 = vadd.f32 %v656, %v807
  %v834 = vadd.f32 %v657, %v812
  %v835 = vadd.f32 %v658, %v817
  %836 = vst [vmem:[#allocation3] sm:$0xff] %v820
  %837 = vst [vmem:[#allocation3 + $0x8] sm:$0xff] %v821
  %838 = vst [vmem:[#allocation3 + $0x10] sm:$0xff] %v822
  %839 = vst [vmem:[#allocation3 + $0x18] sm:$0xff] %v823
  %840 = vst [vmem:[#allocation3 + $0x20] sm:$0xff] %v824
  %841 = vst [vmem:[#allocation3 + $0x28] sm:$0xff] %v825
  %842 = vst [vmem:[#allocation3 + $0x30] sm:$0xff] %v826
  %843 = vst [vmem:[#allocation3 + $0x38] sm:$0xff] %v827
  %844 = vst [vmem:[#allocation3 + $0x40] sm:$0xff] %v828
  %845 = vst [vmem:[#allocation3 + $0x48] sm:$0xff] %v829
  %846 = vst [vmem:[#allocation3 + $0x50] sm:$0xff] %v830
  %847 = vst [vmem:[#allocation3 + $0x58] sm:$0xff] %v831
  %848 = vst [vmem:[#allocation3 + $0x60] sm:$0xff] %v832
  %849 = vst [vmem:[#allocation3 + $0x68] sm:$0xff] %v833
  %850 = vst [vmem:[#allocation3 + $0x70] sm:$0xff] %v834
  %851 = vst [vmem:[#allocation3 + $0x78] sm:$0xff] %v835
  %vm852 = vcmask 7168
  %853 = vst.msk [vmem:[#allocation2] sm:$0xff] %vm852, %v323
  %854 = vst.msk [vmem:[#allocation2 + $0x8] sm:$0xff] %vm852, %v324
  %855 = vst.msk [vmem:[#allocation2 + $0x10] sm:$0xff] %vm852, %v325
  %856 = vst.msk [vmem:[#allocation2 + $0x18] sm:$0xff] %vm852, %v326
  %857 = vst.msk [vmem:[#allocation2 + $0x20] sm:$0xff] %vm852, %v327
  %858 = vst.msk [vmem:[#allocation2 + $0x28] sm:$0xff] %vm852, %v328
  %859 = vst.msk [vmem:[#allocation2 + $0x30] sm:$0xff] %vm852, %v329
  %860 = vst.msk [vmem:[#allocation2 + $0x38] sm:$0xff] %vm852, %v330
  %861 = vst.msk [vmem:[#allocation2 + $0x40] sm:$0xff] %vm852, %v331
  %862 = vst.msk [vmem:[#allocation2 + $0x48] sm:$0xff] %vm852, %v332
  %863 = vst.msk [vmem:[#allocation2 + $0x50] sm:$0xff] %vm852, %v333
  %864 = vst.msk [vmem:[#allocation2 + $0x58] sm:$0xff] %vm852, %v334
  %865 = vst.msk [vmem:[#allocation2 + $0x60] sm:$0xff] %vm852, %v335
  %866 = vst.msk [vmem:[#allocation2 + $0x68] sm:$0xff] %vm852, %v336
  %867 = vst.msk [vmem:[#allocation2 + $0x70] sm:$0xff] %vm852, %v337
  %868 = vst.msk [vmem:[#allocation2 + $0x78] sm:$0xff] %vm852, %v338
  // Predicated region
  $region22: #{sparse_gat_layer.4} parent=0 // pred_check
    %p869 = pneg %p19
  $region23: #{sparse_gat_layer.4} parent=0 // pred_check_branch
    %871 = sbr.rel (%p869) target = $region25
  $region24: #{sparse_gat_layer.4} parent=0 // pred_region
    %v872 = vld [vmem:[#allocation3] sm:$0xff]
    %v873 = vld [vmem:[#allocation3 + $0x8] sm:$0xff]
    %v874 = vld [vmem:[#allocation3 + $0x10] sm:$0xff]
    %v875 = vld [vmem:[#allocation3 + $0x18] sm:$0xff]
    %v876 = vld [vmem:[#allocation3 + $0x20] sm:$0xff]
    %v877 = vld [vmem:[#allocation3 + $0x28] sm:$0xff]
    %v878 = vld [vmem:[#allocation3 + $0x30] sm:$0xff]
    %v879 = vld [vmem:[#allocation3 + $0x38] sm:$0xff]
    %v880 = vld [vmem:[#allocation3 + $0x40] sm:$0xff]
    %v881 = vld [vmem:[#allocation3 + $0x48] sm:$0xff]
    %v882 = vld [vmem:[#allocation3 + $0x50] sm:$0xff]
    %v883 = vld [vmem:[#allocation3 + $0x58] sm:$0xff]
    %v884 = vld [vmem:[#allocation3 + $0x60] sm:$0xff]
    %v885 = vld [vmem:[#allocation3 + $0x68] sm:$0xff]
    %v886 = vld [vmem:[#allocation3 + $0x70] sm:$0xff]
    %v887 = vld [vmem:[#allocation3 + $0x78] sm:$0xff]
    %888 = vst [vmem:[%s4] sm:$0xff] %v872
    %889 = vst [vmem:[%s4 + $0x8] sm:$0xff] %v873
    %890 = vst [vmem:[%s4 + $0x10] sm:$0xff] %v874
    %891 = vst [vmem:[%s4 + $0x18] sm:$0xff] %v875
    %892 = vst [vmem:[%s4 + $0x20] sm:$0xff] %v876
    %893 = vst [vmem:[%s4 + $0x28] sm:$0xff] %v877
    %894 = vst [vmem:[%s4 + $0x30] sm:$0xff] %v878
    %895 = vst [vmem:[%s4 + $0x38] sm:$0xff] %v879
    %896 = vst [vmem:[%s4 + $0x40] sm:$0xff] %v880
    %897 = vst [vmem:[%s4 + $0x48] sm:$0xff] %v881
    %898 = vst [vmem:[%s4 + $0x50] sm:$0xff] %v882
    %899 = vst [vmem:[%s4 + $0x58] sm:$0xff] %v883
    %900 = vst [vmem:[%s4 + $0x60] sm:$0xff] %v884
    %901 = vst [vmem:[%s4 + $0x68] sm:$0xff] %v885
    %902 = vst [vmem:[%s4 + $0x70] sm:$0xff] %v886
    %903 = vst [vmem:[%s4 + $0x78] sm:$0xff] %v887
    %v904 = vld [vmem:[#allocation2] sm:$0xff]
    %v905 = vld [vmem:[#allocation2 + $0x8] sm:$0xff]
    %v906 = vld [vmem:[#allocation2 + $0x10] sm:$0xff]
    %v907 = vld [vmem:[#allocation2 + $0x18] sm:$0xff]
    %v908 = vld [vmem:[#allocation2 + $0x20] sm:$0xff]
    %v909 = vld [vmem:[#allocation2 + $0x28] sm:$0xff]
    %v910 = vld [vmem:[#allocation2 + $0x30] sm:$0xff]
    %v911 = vld [vmem:[#allocation2 + $0x38] sm:$0xff]
    %v912 = vld [vmem:[#allocation2 + $0x40] sm:$0xff]
    %v913 = vld [vmem:[#allocation2 + $0x48] sm:$0xff]
    %v914 = vld [vmem:[#allocation2 + $0x50] sm:$0xff]
    %v915 = vld [vmem:[#allocation2 + $0x58] sm:$0xff]
    %v916 = vld [vmem:[#allocation2 + $0x60] sm:$0xff]
    %v917 = vld [vmem:[#allocation2 + $0x68] sm:$0xff]
    %v918 = vld [vmem:[#allocation2 + $0x70] sm:$0xff]
    %v919 = vld [vmem:[#allocation2 + $0x78] sm:$0xff]
    %920 = vst.msk [vmem:[%s5] sm:$0xff] %vm852, %v904
    %921 = vst.msk [vmem:[%s5 + $0x8] sm:$0xff] %vm852, %v905
    %922 = vst.msk [vmem:[%s5 + $0x10] sm:$0xff] %vm852, %v906
    %923 = vst.msk [vmem:[%s5 + $0x18] sm:$0xff] %vm852, %v907
    %924 = vst.msk [vmem:[%s5 + $0x20] sm:$0xff] %vm852, %v908
    %925 = vst.msk [vmem:[%s5 + $0x28] sm:$0xff] %vm852, %v909
    %926 = vst.msk [vmem:[%s5 + $0x30] sm:$0xff] %vm852, %v910
    %927 = vst.msk [vmem:[%s5 + $0x38] sm:$0xff] %vm852, %v911
    %928 = vst.msk [vmem:[%s5 + $0x40] sm:$0xff] %vm852, %v912
    %929 = vst.msk [vmem:[%s5 + $0x48] sm:$0xff] %vm852, %v913
    %930 = vst.msk [vmem:[%s5 + $0x50] sm:$0xff] %vm852, %v914
    %931 = vst.msk [vmem:[%s5 + $0x58] sm:$0xff] %vm852, %v915
    %932 = vst.msk [vmem:[%s5 + $0x60] sm:$0xff] %vm852, %v916
    %933 = vst.msk [vmem:[%s5 + $0x68] sm:$0xff] %vm852, %v917
    %934 = vst.msk [vmem:[%s5 + $0x70] sm:$0xff] %vm852, %v918
    %935 = vst.msk [vmem:[%s5 + $0x78] sm:$0xff] %vm852, %v919
  $region25: #{sparse_gat_layer.4} parent=0 // pred_fallthru
    _
  // Predicated region
  $region26: #{sparse_gat_layer.4} parent=0 // pred_check
    _
  $region27: #{sparse_gat_layer.4} parent=0 // pred_check_branch
    %937 = sbr.rel (0) target = $region29
  $region28: #{sparse_gat_layer.4} parent=0 // pred_region
    _
  $region29: #{sparse_gat_layer.4} parent=0 // pred_fallthru
    _
  // Predicated region
  $region30: #{sparse_gat_layer.4} parent=0 // pred_check
    _
  $region31: #{sparse_gat_layer.4} parent=0 // pred_check_branch
    %939 = sbr.rel (0) target = $region33
  $region32: #{sparse_gat_layer.4} parent=0 // pred_region
    _
  $region33: #{sparse_gat_layer.4} parent=0 // pred_fallthru
    _
  // Predicated region
  $region34: #{sparse_gat_layer.4} parent=0 // pred_check
    _
  $region35: #{sparse_gat_layer.4} parent=0 // pred_check_branch
    %941 = sbr.rel (0) target = $region37
  $region36: #{sparse_gat_layer.4} parent=0 // pred_region
    _
  $region37: #{sparse_gat_layer.4} parent=0 // pred_fallthru
    _
  // Predicated region
  $region38: #{sparse_gat_layer.4} parent=0 // pred_check
    _
  $region39: #{sparse_gat_layer.4} parent=0 // pred_check_branch
    %943 = sbr.rel (0) target = $region41
  $region40: #{sparse_gat_layer.4} parent=0 // pred_region
    _
  $region41: #{sparse_gat_layer.4} parent=0 // pred_fallthru
    _

</llo_original>
